<compile_context>
chip_gen: v6e
topology: v6e:2x2x1
jax: 0.10.0
libtpu: 0.0.40
codegen_flags: <defaults>
</compile_context>

<pallas_src>
import jax
import jax.numpy as jnp
from jax.experimental import pallas as pl
from jax.experimental.pallas import tpu as pltpu


def _graph_cnn_kernel(v_ref, wv1_ref, wv2_ref, a_ref, wa_ref, bias_ref, o_ref):
    # v_ref:    (N, F)          VMEM  full node-feature slab (shared across i-tiles)
    # wv1_ref:  (O, F)          VMEM  weights for the j-dependent V term
    # wv2_ref:  (O, F)          VMEM  weights for the i-dependent V term
    # a_ref:    (TILE_I, L, N)  VMEM  native layout: a_ref[i, l, j] = A[b, i0 + i, l, j]
    # wa_ref:   (O, L)          SMEM  scalar weights for the A term
    # bias_ref: (O,)            SMEM  scalar bias
    # o_ref:    (TILE_I, O, N)  VMEM  output block in the native PyTorch (b, N, O, N) layout
    tile_i, n_out, _ = o_ref.shape
    n_a = a_ref.shape[1]
    n_full = v_ref.shape[0]

    v_full = v_ref[...]
    if tile_i == n_full:                       # single i-tile: slice is the whole slab
        v_tile = v_full
    else:                                      # slice the i-tile in-kernel (no extra DMA stream)
        i0 = pl.multiple_of(pl.program_id(1) * tile_i, tile_i)
        v_tile = v_ref[pl.ds(i0, tile_i), :]

    # V1 term: vw1[o, j] = sum_f W_V1[o, f] * V[j, f]  -> (O, N); j already on lanes.
    vw1 = jax.lax.dot_general(
        wv1_ref[...], v_full, dimension_numbers=(((1,), (1,)), ((), ())),
        preferred_element_type=jnp.float32)
    # V2 term: vw2[i, o] = sum_f V[i, f] * W_V2[o, f]  -> (TILE_I, O).
    vw2 = jax.lax.dot_general(
        v_tile, wv2_ref[...], dimension_numbers=(((1,), (1,)), ((), ())),
        preferred_element_type=jnp.float32)

    # Load each A plane once (strided sublane loads); reuse across all O outputs.
    a_planes = [a_ref[:, l, :] for l in range(n_a)]

    for o in range(n_out):                     # O is small & static -> unrolled
        # bias folded into the j-row once; (TILE_I, 1) + (1, N) -> (TILE_I, N), f32 accumulate.
        acc = vw2[:, o:o + 1] + (vw1[o:o + 1, :] + bias_ref[o])
        for l in range(n_a):                   # tiny K=L contraction as VPU scalar FMAs
            acc = acc + wa_ref[o, l] * a_planes[l]
        # ReLU (is_relu=True, is_bn=False default path); store the o-th output plane.
        o_ref[:, o, :] = jnp.maximum(acc, 0.0).astype(o_ref.dtype)


def graph_cnn_layer2(A, V, W, bias, *, tile_i=None, out_dtype=None):
    """A: (b, N, L, N), V: (b, N, F), W: (O, L+2F), bias: (O,) -> (b, N, O, N).

    A may be float32 or bfloat16 (accumulation is always f32).  The output dtype follows A
    unless `out_dtype` is given.  V / W / bias are expected in float32.
    """
    b, N, L, N2 = A.shape
    if N2 != N:
        raise ValueError("A must have shape (b, N, L, N)")
    F = V.shape[-1]
    O = W.shape[0]
    if out_dtype is None:
        out_dtype = A.dtype

    # Wrapper-side weight split (tiny arrays).  A-term weights + bias -> SMEM f32 scalars.
    W_A = W[:, :L].astype(jnp.float32)              # (O, L)
    W_V1 = W[:, L:L + F].astype(V.dtype)            # (O, F)
    W_V2 = W[:, L + F:L + 2 * F].astype(V.dtype)    # (O, F)
    bias32 = bias.astype(jnp.float32)

    # ---- generation-aware tiling / VMEM budget ----
    try:
        vmem_cap = int(pltpu.get_tpu_info().vmem_capacity_bytes)
    except Exception:
        vmem_cap = 64 * 1024 * 1024                 # conservative fallback (v7x per-TC VMEM)
    vmem_limit = int(vmem_cap * 0.70)               # leave headroom for compiler scratch
    tile_budget = int(vmem_cap * 0.45)              # budget for the pipelined working set

    def _pad_sublane(d, itemsize):
        m = 8 * max(1, 4 // itemsize)               # f32: 8 sublanes, bf16: 16 (packed)
        return -(-d // m) * m

    a_isz = jnp.dtype(A.dtype).itemsize
    o_isz = jnp.dtype(out_dtype).itemsize
    # Double-buffered A + out blocks, bytes per i-row (includes L/O sublane padding).
    per_row = 2 * N * (_pad_sublane(L, a_isz) * a_isz + _pad_sublane(O, o_isz) * o_isz)
    # Full V slab (lane-padded to 128), conservatively double-buffered, + slack for weights.
    fixed = 2 * N * (-(-F // 128) * 128) * 4 + (2 << 20)

    if tile_i is None:
        cap_rows = max(8, (tile_budget - fixed) // per_row)
        if b == 1 and N >= 16:
            # Keep >= 2 grid steps so v7x's second TensorCore / pipelining has work.
            cap_rows = min(cap_rows, N // 2)
        cap_rows = int(min(N, cap_rows))
        divisors = [t for t in range(1, cap_rows + 1) if N % t == 0]
        divisors8 = [t for t in divisors if t % 8 == 0]
        tile_i = (divisors8 or divisors)[-1]
    if N % tile_i != 0:
        raise ValueError(f"tile_i={tile_i} must divide N={N}")
    num_i = N // tile_i

    return pl.pallas_call(
        _graph_cnn_kernel,
        out_shape=jax.ShapeDtypeStruct((b, N, O, N), out_dtype),
        grid=(b, num_i),
        in_specs=[
            # Full V slab: constant block index along the i-tile axis -> not re-DMA'd per tile.
            pl.BlockSpec((None, N, F), lambda bi, ti: (bi, 0, 0)),
            pl.BlockSpec((O, F), lambda bi, ti: (0, 0)),
            pl.BlockSpec((O, F), lambda bi, ti: (0, 0)),
            # A in its native (b, N, L, N) layout, tiled over i; lane dim is j (= N).
            pl.BlockSpec((None, tile_i, L, N), lambda bi, ti: (bi, ti, 0, 0)),
            # A-term weights and bias as SMEM scalars.
            pl.BlockSpec(memory_space=pltpu.MemorySpace.SMEM),
            pl.BlockSpec(memory_space=pltpu.MemorySpace.SMEM),
        ],
        # Output written directly in the PyTorch (b, N, O, N) layout (no wrapper transpose).
        out_specs=pl.BlockSpec((None, tile_i, O, N), lambda bi, ti: (bi, ti, 0, 0)),
        compiler_params=pltpu.CompilerParams(
            dimension_semantics=("parallel", "parallel"),
            vmem_limit_bytes=vmem_limit),
    )(V, W_V1, W_V2, A, W_A, bias32)


def _reference_forward(A, V, W, bias):
    """Pure-JAX transcription of the PyTorch forward (is_relu=True, is_bn=False)."""
    b, N, L, _ = A.shape
    F = V.shape[-1]
    A1 = jnp.transpose(A, (0, 1, 3, 2))                               # (b,N,N,L)
    V1 = jnp.broadcast_to(V[:, None, :, :], (b, N, N, F))             # depends on j
    V2 = jnp.broadcast_to(V[:, :, None, :], (b, N, N, F))             # depends on i
    cat = jnp.concatenate([A1, V1, V2], axis=3)                       # (b,N,N,L+2F)
    out = jnp.einsum('bijk,ok->bijo', cat, W) + bias                  # (b,N,N,O)
    out = jnp.transpose(out, (0, 1, 3, 2))                            # (b,N,O,N)
    return jnp.maximum(out, 0.0)                                      # ReLU


if __name__ == "__main__":
    # Module config (small, consistent with the forward):
    input_features_V = 8    # F
    no_A_in = 4             # L
    no_A_out = 4            # O
    batch = 2
    N = 16

    key = jax.random.PRNGKey(0)
    kA, kV, kW = jax.random.split(key, 3)

    A = jax.random.normal(kA, (batch, N, no_A_in, N), dtype=jnp.float32)
    V = jax.random.normal(kV, (batch, N, input_features_V), dtype=jnp.float32)

    # Deterministic parameter init matching the PyTorch __init__:
    #   weight ~ N(0, 1/sqrt(no_A_out * (no_A_in + 2*input_features_V))), bias = 0.1
    fan = no_A_in + 2 * input_features_V
    std = 1.0 / (no_A_out * fan) ** 0.5
    W = std * jax.random.normal(kW, (no_A_out, fan), dtype=jnp.float32)
    bias = jnp.full((no_A_out,), 0.1, dtype=jnp.float32)

    # f32 path: bit-level parity with the PyTorch module.
    out = jax.block_until_ready(jax.jit(graph_cnn_layer2)(A, V, W, bias))
    ref = _reference_forward(A, V, W, bias)
    assert out.shape == (batch, N, no_A_out, N)
    assert out.dtype == jnp.float32
    assert jnp.allclose(out, ref, atol=1e-5, rtol=1e-5), "f32 mismatch vs reference"

    # bf16 I/O path (halves the two dominant HBM streams); accumulation stays f32 in-kernel.
    A_bf16 = A.astype(jnp.bfloat16)
    out_bf = jax.block_until_ready(jax.jit(graph_cnn_layer2)(A_bf16, V, W, bias))
    ref_bf = _reference_forward(A_bf16.astype(jnp.float32), V, W, bias)
    assert out_bf.dtype == jnp.bfloat16
    assert jnp.allclose(out_bf.astype(jnp.float32), ref_bf, atol=3e-2, rtol=3e-2), \
        "bf16 mismatch vs reference"

    print("KERNEL_OK")
</pallas_src>

<mosaic_0001>
module attributes {stable_mosaic.version = 11 : i64} {
  func.func @_graph_cnn_kernel(%arg0: i32, %arg1: i32, %arg2: memref<1x16x8xf32, #tpu.memory_space<vmem>>, %arg3: memref<4x8xf32, #tpu.memory_space<vmem>>, %arg4: memref<4x8xf32, #tpu.memory_space<vmem>>, %arg5: memref<1x16x4x16xf32, #tpu.memory_space<vmem>>, %arg6: memref<4x4xf32, #tpu.memory_space<smem>>, %arg7: memref<4xf32, #tpu.memory_space<smem>>, %arg8: memref<1x16x4x16xf32, #tpu.memory_space<vmem>>) attributes {dimension_semantics = [#tpu.dimension_semantics<parallel>, #tpu.dimension_semantics<parallel>], iteration_bounds = array<i64: 2, 1>, scalar_prefetch = 0 : i64, scratch_operands = 0 : i64, tpu.core_type = #tpu.core_type<tc>, window_params = [{transform_indices = @transform_0, window_bounds = array<i64: 1, 16, 8>}, {pipeline_mode = #tpu.pipeline_mode<synchronous>, transform_indices = @transform_1, window_bounds = array<i64: 4, 8>}, {pipeline_mode = #tpu.pipeline_mode<synchronous>, transform_indices = @transform_2, window_bounds = array<i64: 4, 8>}, {transform_indices = @transform_3, window_bounds = array<i64: 1, 16, 4, 16>}, {transform_indices = @transform_4, window_bounds = array<i64: 4, 4>}, {transform_indices = @transform_5, window_bounds = array<i64: 4>}, {transform_indices = @transform_6, window_bounds = array<i64: 1, 16, 4, 16>}]} {
    %c0 = arith.constant 0 : index
    %c0_0 = arith.constant 0 : index
    %c0_1 = arith.constant 0 : index
    %0 = vector.load %arg2[%c0, %c0_0, %c0_1] : memref<1x16x8xf32, #tpu.memory_space<vmem>>, vector<1x16x8xf32>
    %1 = vector.shape_cast %0 : vector<1x16x8xf32> to vector<16x8xf32>
    %c0_2 = arith.constant 0 : index
    %c0_3 = arith.constant 0 : index
    %2 = vector.load %arg3[%c0_2, %c0_3] : memref<4x8xf32, #tpu.memory_space<vmem>>, vector<4x8xf32>
    %cst = arith.constant dense<0.000000e+00> : vector<4x16xf32>
    %3 = tpu.matmul %2, %1, %cst {dimension_numbers = #tpu.dot_dimension_numbers<[1], [1], [0], [0], [0, 0, 1, 0], [], []>} : vector<4x8xf32>, vector<16x8xf32>, vector<4x16xf32> -> vector<4x16xf32>
    %c0_4 = arith.constant 0 : index
    %c0_5 = arith.constant 0 : index
    %4 = vector.load %arg4[%c0_4, %c0_5] : memref<4x8xf32, #tpu.memory_space<vmem>>, vector<4x8xf32>
    %cst_6 = arith.constant dense<0.000000e+00> : vector<16x4xf32>
    %5 = tpu.matmul %1, %4, %cst_6 {dimension_numbers = #tpu.dot_dimension_numbers<[1], [1], [0], [0], [0, 0, 1, 0], [], []>} : vector<16x8xf32>, vector<4x8xf32>, vector<16x4xf32> -> vector<16x4xf32>
    %c0_7 = arith.constant 0 : index
    %c0_8 = arith.constant 0 : index
    %c0_9 = arith.constant 0 : index
    %c0_10 = arith.constant 0 : index
    %6 = vector.load %arg5[%c0_7, %c0_8, %c0_9, %c0_10] : memref<1x16x4x16xf32, #tpu.memory_space<vmem>>, vector<1x16x1x16xf32>
    %7 = vector.shape_cast %6 : vector<1x16x1x16xf32> to vector<16x16xf32>
    %c0_11 = arith.constant 0 : index
    %c0_12 = arith.constant 0 : index
    %c1 = arith.constant 1 : index
    %c0_13 = arith.constant 0 : index
    %8 = vector.load %arg5[%c0_11, %c0_12, %c1, %c0_13] : memref<1x16x4x16xf32, #tpu.memory_space<vmem>>, vector<1x16x1x16xf32>
    %9 = vector.shape_cast %8 : vector<1x16x1x16xf32> to vector<16x16xf32>
    %c0_14 = arith.constant 0 : index
    %c0_15 = arith.constant 0 : index
    %c2 = arith.constant 2 : index
    %c0_16 = arith.constant 0 : index
    %10 = vector.load %arg5[%c0_14, %c0_15, %c2, %c0_16] : memref<1x16x4x16xf32, #tpu.memory_space<vmem>>, vector<1x16x1x16xf32>
    %11 = vector.shape_cast %10 : vector<1x16x1x16xf32> to vector<16x16xf32>
    %c0_17 = arith.constant 0 : index
    %c0_18 = arith.constant 0 : index
    %c3 = arith.constant 3 : index
    %c0_19 = arith.constant 0 : index
    %12 = vector.load %arg5[%c0_17, %c0_18, %c3, %c0_19] : memref<1x16x4x16xf32, #tpu.memory_space<vmem>>, vector<1x16x1x16xf32>
    %13 = vector.shape_cast %12 : vector<1x16x1x16xf32> to vector<16x16xf32>
    %14 = vector.extract_strided_slice %5 {offsets = [0, 0], sizes = [16, 1], strides = [1, 1]} : vector<16x4xf32> to vector<16x1xf32>
    %15 = vector.extract_strided_slice %3 {offsets = [0, 0], sizes = [1, 16], strides = [1, 1]} : vector<4x16xf32> to vector<1x16xf32>
    %c0_20 = arith.constant 0 : index
    %16 = memref.load %arg7[%c0_20] : memref<4xf32, #tpu.memory_space<smem>>
    %17 = vector.broadcast %16 : f32 to vector<1x16xf32>
    %18 = arith.addf %15, %17 : vector<1x16xf32>
    %19 = vector.broadcast %14 : vector<16x1xf32> to vector<16x16xf32>
    %20 = vector.broadcast %18 : vector<1x16xf32> to vector<16x16xf32>
    %21 = arith.addf %19, %20 : vector<16x16xf32>
    %c0_21 = arith.constant 0 : index
    %c0_22 = arith.constant 0 : index
    %22 = memref.load %arg6[%c0_21, %c0_22] : memref<4x4xf32, #tpu.memory_space<smem>>
    %23 = vector.broadcast %22 : f32 to vector<16x16xf32>
    %24 = arith.mulf %23, %7 : vector<16x16xf32>
    %25 = arith.addf %21, %24 : vector<16x16xf32>
    %c0_23 = arith.constant 0 : index
    %c1_24 = arith.constant 1 : index
    %26 = memref.load %arg6[%c0_23, %c1_24] : memref<4x4xf32, #tpu.memory_space<smem>>
    %27 = vector.broadcast %26 : f32 to vector<16x16xf32>
    %28 = arith.mulf %27, %9 : vector<16x16xf32>
    %29 = arith.addf %25, %28 : vector<16x16xf32>
    %c0_25 = arith.constant 0 : index
    %c2_26 = arith.constant 2 : index
    %30 = memref.load %arg6[%c0_25, %c2_26] : memref<4x4xf32, #tpu.memory_space<smem>>
    %31 = vector.broadcast %30 : f32 to vector<16x16xf32>
    %32 = arith.mulf %31, %11 : vector<16x16xf32>
    %33 = arith.addf %29, %32 : vector<16x16xf32>
    %c0_27 = arith.constant 0 : index
    %c3_28 = arith.constant 3 : index
    %34 = memref.load %arg6[%c0_27, %c3_28] : memref<4x4xf32, #tpu.memory_space<smem>>
    %35 = vector.broadcast %34 : f32 to vector<16x16xf32>
    %36 = arith.mulf %35, %13 : vector<16x16xf32>
    %37 = arith.addf %33, %36 : vector<16x16xf32>
    %cst_29 = arith.constant 0.000000e+00 : f32
    %38 = vector.broadcast %cst_29 : f32 to vector<16x16xf32>
    %39 = arith.maximumf %37, %38 : vector<16x16xf32>
    %c0_30 = arith.constant 0 : index
    %c0_31 = arith.constant 0 : index
    %c0_32 = arith.constant 0 : index
    %c0_33 = arith.constant 0 : index
    %40 = vector.load %arg8[%c0_30, %c0_31, %c0_32, %c0_33] : memref<1x16x4x16xf32, #tpu.memory_space<vmem>>, vector<1x16x1x16xf32>
    %41 = vector.shape_cast %40 : vector<1x16x1x16xf32> to vector<16x16xf32>
    %42 = vector.shape_cast %39 : vector<16x16xf32> to vector<1x16x1x16xf32>
    tpu.vector_store %arg8[%c0_30, %c0_31, %c0_32, %c0_33], %42 {strides = array<i32>} : memref<1x16x4x16xf32, #tpu.memory_space<vmem>>, vector<1x16x1x16xf32>,
    %43 = vector.extract_strided_slice %5 {offsets = [0, 1], sizes = [16, 1], strides = [1, 1]} : vector<16x4xf32> to vector<16x1xf32>
    %44 = vector.extract_strided_slice %3 {offsets = [1, 0], sizes = [1, 16], strides = [1, 1]} : vector<4x16xf32> to vector<1x16xf32>
    %c1_34 = arith.constant 1 : index
    %45 = memref.load %arg7[%c1_34] : memref<4xf32, #tpu.memory_space<smem>>
    %46 = vector.broadcast %45 : f32 to vector<1x16xf32>
    %47 = arith.addf %44, %46 : vector<1x16xf32>
    %48 = vector.broadcast %43 : vector<16x1xf32> to vector<16x16xf32>
    %49 = vector.broadcast %47 : vector<1x16xf32> to vector<16x16xf32>
    %50 = arith.addf %48, %49 : vector<16x16xf32>
    %c1_35 = arith.constant 1 : index
    %c0_36 = arith.constant 0 : index
    %51 = memref.load %arg6[%c1_35, %c0_36] : memref<4x4xf32, #tpu.memory_space<smem>>
    %52 = vector.broadcast %51 : f32 to vector<16x16xf32>
    %53 = arith.mulf %52, %7 : vector<16x16xf32>
    %54 = arith.addf %50, %53 : vector<16x16xf32>
    %c1_37 = arith.constant 1 : index
    %c1_38 = arith.constant 1 : index
    %55 = memref.load %arg6[%c1_37, %c1_38] : memref<4x4xf32, #tpu.memory_space<smem>>
    %56 = vector.broadcast %55 : f32 to vector<16x16xf32>
    %57 = arith.mulf %56, %9 : vector<16x16xf32>
    %58 = arith.addf %54, %57 : vector<16x16xf32>
    %c1_39 = arith.constant 1 : index
    %c2_40 = arith.constant 2 : index
    %59 = memref.load %arg6[%c1_39, %c2_40] : memref<4x4xf32, #tpu.memory_space<smem>>
    %60 = vector.broadcast %59 : f32 to vector<16x16xf32>
    %61 = arith.mulf %60, %11 : vector<16x16xf32>
    %62 = arith.addf %58, %61 : vector<16x16xf32>
    %c1_41 = arith.constant 1 : index
    %c3_42 = arith.constant 3 : index
    %63 = memref.load %arg6[%c1_41, %c3_42] : memref<4x4xf32, #tpu.memory_space<smem>>
    %64 = vector.broadcast %63 : f32 to vector<16x16xf32>
    %65 = arith.mulf %64, %13 : vector<16x16xf32>
    %66 = arith.addf %62, %65 : vector<16x16xf32>
    %cst_43 = arith.constant 0.000000e+00 : f32
    %67 = vector.broadcast %cst_43 : f32 to vector<16x16xf32>
    %68 = arith.maximumf %66, %67 : vector<16x16xf32>
    %c0_44 = arith.constant 0 : index
    %c0_45 = arith.constant 0 : index
    %c1_46 = arith.constant 1 : index
    %c0_47 = arith.constant 0 : index
    %69 = vector.load %arg8[%c0_44, %c0_45, %c1_46, %c0_47] : memref<1x16x4x16xf32, #tpu.memory_space<vmem>>, vector<1x16x1x16xf32>
    %70 = vector.shape_cast %69 : vector<1x16x1x16xf32> to vector<16x16xf32>
    %71 = vector.shape_cast %68 : vector<16x16xf32> to vector<1x16x1x16xf32>
    tpu.vector_store %arg8[%c0_44, %c0_45, %c1_46, %c0_47], %71 {strides = array<i32>} : memref<1x16x4x16xf32, #tpu.memory_space<vmem>>, vector<1x16x1x16xf32>,
    %72 = vector.extract_strided_slice %5 {offsets = [0, 2], sizes = [16, 1], strides = [1, 1]} : vector<16x4xf32> to vector<16x1xf32>
    %73 = vector.extract_strided_slice %3 {offsets = [2, 0], sizes = [1, 16], strides = [1, 1]} : vector<4x16xf32> to vector<1x16xf32>
    %c2_48 = arith.constant 2 : index
    %74 = memref.load %arg7[%c2_48] : memref<4xf32, #tpu.memory_space<smem>>
    %75 = vector.broadcast %74 : f32 to vector<1x16xf32>
    %76 = arith.addf %73, %75 : vector<1x16xf32>
    %77 = vector.broadcast %72 : vector<16x1xf32> to vector<16x16xf32>
    %78 = vector.broadcast %76 : vector<1x16xf32> to vector<16x16xf32>
    %79 = arith.addf %77, %78 : vector<16x16xf32>
    %c2_49 = arith.constant 2 : index
    %c0_50 = arith.constant 0 : index
    %80 = memref.load %arg6[%c2_49, %c0_50] : memref<4x4xf32, #tpu.memory_space<smem>>
    %81 = vector.broadcast %80 : f32 to vector<16x16xf32>
    %82 = arith.mulf %81, %7 : vector<16x16xf32>
    %83 = arith.addf %79, %82 : vector<16x16xf32>
    %c2_51 = arith.constant 2 : index
    %c1_52 = arith.constant 1 : index
    %84 = memref.load %arg6[%c2_51, %c1_52] : memref<4x4xf32, #tpu.memory_space<smem>>
    %85 = vector.broadcast %84 : f32 to vector<16x16xf32>
    %86 = arith.mulf %85, %9 : vector<16x16xf32>
    %87 = arith.addf %83, %86 : vector<16x16xf32>
    %c2_53 = arith.constant 2 : index
    %c2_54 = arith.constant 2 : index
    %88 = memref.load %arg6[%c2_53, %c2_54] : memref<4x4xf32, #tpu.memory_space<smem>>
    %89 = vector.broadcast %88 : f32 to vector<16x16xf32>
    %90 = arith.mulf %89, %11 : vector<16x16xf32>
    %91 = arith.addf %87, %90 : vector<16x16xf32>
    %c2_55 = arith.constant 2 : index
    %c3_56 = arith.constant 3 : index
    %92 = memref.load %arg6[%c2_55, %c3_56] : memref<4x4xf32, #tpu.memory_space<smem>>
    %93 = vector.broadcast %92 : f32 to vector<16x16xf32>
    %94 = arith.mulf %93, %13 : vector<16x16xf32>
    %95 = arith.addf %91, %94 : vector<16x16xf32>
    %cst_57 = arith.constant 0.000000e+00 : f32
    %96 = vector.broadcast %cst_57 : f32 to vector<16x16xf32>
    %97 = arith.maximumf %95, %96 : vector<16x16xf32>
    %c0_58 = arith.constant 0 : index
    %c0_59 = arith.constant 0 : index
    %c2_60 = arith.constant 2 : index
    %c0_61 = arith.constant 0 : index
    %98 = vector.load %arg8[%c0_58, %c0_59, %c2_60, %c0_61] : memref<1x16x4x16xf32, #tpu.memory_space<vmem>>, vector<1x16x1x16xf32>
    %99 = vector.shape_cast %98 : vector<1x16x1x16xf32> to vector<16x16xf32>
    %100 = vector.shape_cast %97 : vector<16x16xf32> to vector<1x16x1x16xf32>
    tpu.vector_store %arg8[%c0_58, %c0_59, %c2_60, %c0_61], %100 {strides = array<i32>} : memref<1x16x4x16xf32, #tpu.memory_space<vmem>>, vector<1x16x1x16xf32>,
    %101 = vector.extract_strided_slice %5 {offsets = [0, 3], sizes = [16, 1], strides = [1, 1]} : vector<16x4xf32> to vector<16x1xf32>
    %102 = vector.extract_strided_slice %3 {offsets = [3, 0], sizes = [1, 16], strides = [1, 1]} : vector<4x16xf32> to vector<1x16xf32>
    %c3_62 = arith.constant 3 : index
    %103 = memref.load %arg7[%c3_62] : memref<4xf32, #tpu.memory_space<smem>>
    %104 = vector.broadcast %103 : f32 to vector<1x16xf32>
    %105 = arith.addf %102, %104 : vector<1x16xf32>
    %106 = vector.broadcast %101 : vector<16x1xf32> to vector<16x16xf32>
    %107 = vector.broadcast %105 : vector<1x16xf32> to vector<16x16xf32>
    %108 = arith.addf %106, %107 : vector<16x16xf32>
    %c3_63 = arith.constant 3 : index
    %c0_64 = arith.constant 0 : index
    %109 = memref.load %arg6[%c3_63, %c0_64] : memref<4x4xf32, #tpu.memory_space<smem>>
    %110 = vector.broadcast %109 : f32 to vector<16x16xf32>
    %111 = arith.mulf %110, %7 : vector<16x16xf32>
    %112 = arith.addf %108, %111 : vector<16x16xf32>
    %c3_65 = arith.constant 3 : index
    %c1_66 = arith.constant 1 : index
    %113 = memref.load %arg6[%c3_65, %c1_66] : memref<4x4xf32, #tpu.memory_space<smem>>
    %114 = vector.broadcast %113 : f32 to vector<16x16xf32>
    %115 = arith.mulf %114, %9 : vector<16x16xf32>
    %116 = arith.addf %112, %115 : vector<16x16xf32>
    %c3_67 = arith.constant 3 : index
    %c2_68 = arith.constant 2 : index
    %117 = memref.load %arg6[%c3_67, %c2_68] : memref<4x4xf32, #tpu.memory_space<smem>>
    %118 = vector.broadcast %117 : f32 to vector<16x16xf32>
    %119 = arith.mulf %118, %11 : vector<16x16xf32>
    %120 = arith.addf %116, %119 : vector<16x16xf32>
    %c3_69 = arith.constant 3 : index
    %c3_70 = arith.constant 3 : index
    %121 = memref.load %arg6[%c3_69, %c3_70] : memref<4x4xf32, #tpu.memory_space<smem>>
    %122 = vector.broadcast %121 : f32 to vector<16x16xf32>
    %123 = arith.mulf %122, %13 : vector<16x16xf32>
    %124 = arith.addf %120, %123 : vector<16x16xf32>
    %cst_71 = arith.constant 0.000000e+00 : f32
    %125 = vector.broadcast %cst_71 : f32 to vector<16x16xf32>
    %126 = arith.maximumf %124, %125 : vector<16x16xf32>
    %c0_72 = arith.constant 0 : index
    %c0_73 = arith.constant 0 : index
    %c3_74 = arith.constant 3 : index
    %c0_75 = arith.constant 0 : index
    %127 = vector.load %arg8[%c0_72, %c0_73, %c3_74, %c0_75] : memref<1x16x4x16xf32, #tpu.memory_space<vmem>>, vector<1x16x1x16xf32>
    %128 = vector.shape_cast %127 : vector<1x16x1x16xf32> to vector<16x16xf32>
    %129 = vector.shape_cast %126 : vector<16x16xf32> to vector<1x16x1x16xf32>
    tpu.vector_store %arg8[%c0_72, %c0_73, %c3_74, %c0_75], %129 {strides = array<i32>} : memref<1x16x4x16xf32, #tpu.memory_space<vmem>>, vector<1x16x1x16xf32>,
    return
  }
  func.func @transform_0(%arg0: i32, %arg1: i32) -> (i32, i32, i32) {
    %c0_i32 = arith.constant 0 : i32
    %c0_i32_0 = arith.constant 0 : i32
    %c0_i32_1 = arith.constant 0 : i32
    return %arg0, %c0_i32, %c0_i32_0 : i32, i32, i32
  }
  func.func @transform_1(%arg0: i32, %arg1: i32) -> (i32, i32) {
    %c0_i32 = arith.constant 0 : i32
    %c0_i32_0 = arith.constant 0 : i32
    %c0_i32_1 = arith.constant 0 : i32
    return %c0_i32, %c0_i32_0 : i32, i32
  }
  func.func @transform_2(%arg0: i32, %arg1: i32) -> (i32, i32) {
    %c0_i32 = arith.constant 0 : i32
    %c0_i32_0 = arith.constant 0 : i32
    %c0_i32_1 = arith.constant 0 : i32
    return %c0_i32, %c0_i32_0 : i32, i32
  }
  func.func @transform_3(%arg0: i32, %arg1: i32) -> (i32, i32, i32, i32) {
    %c0_i32 = arith.constant 0 : i32
    %c0_i32_0 = arith.constant 0 : i32
    %c0_i32_1 = arith.constant 0 : i32
    return %arg0, %arg1, %c0_i32, %c0_i32_0 : i32, i32, i32, i32
  }
  func.func @transform_4(%arg0: i32, %arg1: i32) -> (i32, i32) {
    %c0_i32 = arith.constant 0 : i32
    %c0_i32_0 = arith.constant 0 : i32
    %c0_i32_1 = arith.constant 0 : i32
    return %c0_i32, %c0_i32_0 : i32, i32
  }
  func.func @transform_5(%arg0: i32, %arg1: i32) -> i32 {
    %c0_i32 = arith.constant 0 : i32
    %c0_i32_0 = arith.constant 0 : i32
    return %c0_i32 : i32
  }
  func.func @transform_6(%arg0: i32, %arg1: i32) -> (i32, i32, i32, i32) {
    %c0_i32 = arith.constant 0 : i32
    %c0_i32_0 = arith.constant 0 : i32
    %c0_i32_1 = arith.constant 0 : i32
    return %arg0, %arg1, %c0_i32, %c0_i32_0 : i32, i32, i32, i32
  }
}

</mosaic_0001>

<llo_original>
// kernel: graph_cnn_layer2.1
$region0: #{graph_cnn_layer2.1}
  #allocation0 [shape = 'u32[]', space=smem, size = 0x4, offset = 0x4, fixed_abs, tag = 'smem constant byte address 0x4 - core index']
  #allocation1 [shape = 'u32[144,128]{1,0:T(1,128)}', space=vmem, size = 0x12000, scoped, tag = 'internal scratch']
  %s0 = inlined_call_operand.vmem [shape: f32[2,16,8], index: 0, kind: input, shape index: {}]
  %s1 = inlined_call_operand.vmem [shape: f32[4,8], index: 1, kind: input, shape index: {}]
  %s2 = inlined_call_operand.vmem [shape: f32[4,8], index: 2, kind: input, shape index: {}]
  %s3 = inlined_call_operand.hbm [shape: f32[2,16,4,16], index: 3, kind: input, shape index: {}]
  %s4 = inlined_call_operand.vmem [shape: f32[4,4], index: 4, kind: input, shape index: {}]
  %s5 = inlined_call_operand.vmem [shape: f32[4], index: 5, kind: input, shape index: {}]
  %s6 = inlined_call_operand.hbm [shape: f32[2,16,4,16], index: 6, kind: output, shape index: {}]
  %s7 = sld [smem:[#allocation0]]
  $region69: #{graph_cnn_layer2.1} parent=0
    _
  %s9 = ssub.s32 1, %s7
  %s10 = scalar_select 0, %s9, %s7
  $region1: #{graph_cnn_layer2.1} parent=0
    #allocation2 [shape = 'u8[65536]{0}', space=vmem, size = 0x10000, scoped, tag = 'input window, operand 3']
    #allocation3 [shape = 's32[2]{0}', space=sflag, size = 0x8, scoped, tag = 'scoped memory for graph_cnn_layer2.1']
    #allocation4 [shape = 's32[2]{0}', space=sflag, size = 0x8, scoped, tag = 'scoped memory for graph_cnn_layer2.1']
    #allocation5 [shape = 's32[2]{0}', space=sflag, size = 0x8, scoped, tag = 'scoped memory for graph_cnn_layer2.1']
    #allocation6 [shape = 'u8[2048]{0}', space=smem, size = 0x800, scoped, tag = 'input window, operand 4, single buffered']
    #allocation7 [shape = 'u8[512]{0}', space=smem, size = 0x200, scoped, tag = 'input window, operand 5, single buffered']
    #allocation8 [shape = 's32[1]{0}', space=sflag, size = 0x4, scoped, tag = 'scoped memory for graph_cnn_layer2.1']
    #allocation9 [shape = 'u8[65536]{0}', space=vmem, size = 0x10000, scoped, tag = 'output window, operand 0']
    %11 = vsyncpa [#allocation3], 0
    %s12 = scalar_lea.sflag [#allocation3], 1
    %13 = vsyncpa %s12, 0
    %14 = vsyncpa [#allocation5], 0
    %15 = vsyncpa [#allocation8], 0
    %16 = vsyncpa [#allocation4], 0
    %s17 = scalar_lea.sflag [#allocation4], 1
    %18 = vsyncpa %s17, 0
    loop: start=0, step=1, limit=4
    $region2: #{graph_cnn_layer2.1} parent=1 // loop_pre_header
      _
    $region3: #{graph_cnn_layer2.1} parent=1 // loop_header
      %s20 = sphi 0, %s24
      %p21 = scmp.ge.s32.totalorder %s20, 4
      %s27 = sphi 0, %s39
      %s28 = sphi 0, %s35
      %s29 = sphi 0, %s27
      %s30 = sphi 0, %s28
      %s31 = sphi 0, %s29
      %s32 = sphi 0, %s30
      %s42 = sphi 0, %s44
      %s45 = sphi 0, %s42
      %s46 = sphi 0, %s45
      %s62 = sphi 0, %s46
      %s66 = sphi 0, %s66
      %s68 = sphi 0, %s66
      %s69 = sphi 0, %s68
      %s83 = sphi 0, %s69
      %s87 = sphi 0, %s87
      %s89 = sphi 0, %s87
      %s90 = sphi 0, %s89
      %s104 = sphi 0, %s90
      %s112 = sphi 0, %s114
      %s115 = sphi 0, %s112
      %s116 = sphi 0, %s115
      %s132 = sphi 0, %s116
      %s136 = sphi 0, %s136
      %s138 = sphi 0, %s136
      %s139 = sphi 0, %s138
      %s153 = sphi 0, %s139
      %s157 = sphi 0, %s157
      %s159 = sphi 0, %s157
      %s160 = sphi 0, %s159
      %s174 = sphi 0, %s160
      %s182 = sphi 0, %s184
      %s185 = sphi 0, %s182
      %s186 = sphi 0, %s185
      %s202 = sphi 0, %s186
    $region4: #{graph_cnn_layer2.1} parent=1 // loop_header_branch
      %23 = sbr.rel (%p21) target = $region8
    $region5: #{graph_cnn_layer2.1} parent=1 // loop_body
      %s25 = ssub.s32 %s20, 1
      %s26 = ssub.s32 %s20, 2
      %s33 = sadd.s32 1, %s28
      %p34 = scmp.ge.s32.totalorder %s33, 1
      %s35 = scalar_select %p34, 0, %s33
      %s36 = sadd.s32 1, %s27
      %s37 = scalar_select %p34, %s36, %s27
      %p38 = scmp.ge.s32.totalorder %s37, 2
      %s39 = scalar_select %p38, 0, %s37
      %s40 = ssub.s32 %s27, %s39
      %p41 = scmp.eq.s32.totalorder %s40, 0
      %s43 = sadd.s32 %s42, 1
      %s44 = scalar_select %p41, %s42, %s43
      %p47 = pneg %p41
      %p48 = scmp.eq.s32.totalorder %s20, 1
      %p49 = por %p47, %p48
      %p50 = scmp.ne.s32.totalorder %s42, %s45
      %p51 = scmp.eq.s32.totalorder %s20, 0
      %p52 = por %p50, %p51
      %p53 = scmp.ne.s32.totalorder %s42, %s45
      %p54 = scmp.eq.s32.totalorder %s25, 1
      %p55 = por %p53, %p54
      %p56 = scmp.ne.s32.totalorder %s45, %s46
      %p57 = scmp.eq.s32.totalorder %s25, 0
      %p58 = por %p56, %p57
      %p59 = scmp.ne.s32.totalorder %s45, %s46
      %p60 = scmp.eq.s32.totalorder %s26, 1
      %p61 = por %p59, %p60
      %p63 = scmp.ne.s32.totalorder %s46, %s62
      %p64 = scmp.eq.s32.totalorder %s26, 0
      %p65 = por %p63, %p64
      %s67 = sadd.s32 %s66, 1
      %p70 = scmp.eq.s32.totalorder %s20, 1
      %p71 = scmp.ne.s32.totalorder %s66, %s68
      %p72 = scmp.eq.s32.totalorder %s20, 0
      %p73 = por %p71, %p72
      %p74 = scmp.ne.s32.totalorder %s66, %s68
      %p75 = scmp.eq.s32.totalorder %s25, 1
      %p76 = por %p74, %p75
      %p77 = scmp.ne.s32.totalorder %s68, %s69
      %p78 = scmp.eq.s32.totalorder %s25, 0
      %p79 = por %p77, %p78
      %p80 = scmp.ne.s32.totalorder %s68, %s69
      %p81 = scmp.eq.s32.totalorder %s26, 1
      %p82 = por %p80, %p81
      %p84 = scmp.ne.s32.totalorder %s69, %s83
      %p85 = scmp.eq.s32.totalorder %s26, 0
      %p86 = por %p84, %p85
      %s88 = sadd.s32 %s87, 1
      %p91 = scmp.eq.s32.totalorder %s20, 1
      %p92 = scmp.ne.s32.totalorder %s87, %s89
      %p93 = scmp.eq.s32.totalorder %s20, 0
      %p94 = por %p92, %p93
      %p95 = scmp.ne.s32.totalorder %s87, %s89
      %p96 = scmp.eq.s32.totalorder %s25, 1
      %p97 = por %p95, %p96
      %p98 = scmp.ne.s32.totalorder %s89, %s90
      %p99 = scmp.eq.s32.totalorder %s25, 0
      %p100 = por %p98, %p99
      %p101 = scmp.ne.s32.totalorder %s89, %s90
      %p102 = scmp.eq.s32.totalorder %s26, 1
      %p103 = por %p101, %p102
      %p105 = scmp.ne.s32.totalorder %s90, %s104
      %p106 = scmp.eq.s32.totalorder %s26, 0
      %p107 = por %p105, %p106
      %s108 = ssub.s32 %s27, %s39
      %s109 = ssub.s32 %s28, %s35
      %s110 = sor.u32 %s108, %s109
      %p111 = scmp.eq.s32.totalorder %s110, 0
      %s113 = sadd.s32 %s112, 1
      %s114 = scalar_select %p111, %s112, %s113
      %p117 = pneg %p111
      %p118 = scmp.eq.s32.totalorder %s20, 1
      %p119 = por %p117, %p118
      %p120 = scmp.ne.s32.totalorder %s112, %s115
      %p121 = scmp.eq.s32.totalorder %s20, 0
      %p122 = por %p120, %p121
      %p123 = scmp.ne.s32.totalorder %s112, %s115
      %p124 = scmp.eq.s32.totalorder %s25, 1
      %p125 = por %p123, %p124
      %p126 = scmp.ne.s32.totalorder %s115, %s116
      %p127 = scmp.eq.s32.totalorder %s25, 0
      %p128 = por %p126, %p127
      %p129 = scmp.ne.s32.totalorder %s115, %s116
      %p130 = scmp.eq.s32.totalorder %s26, 1
      %p131 = por %p129, %p130
      %p133 = scmp.ne.s32.totalorder %s116, %s132
      %p134 = scmp.eq.s32.totalorder %s26, 0
      %p135 = por %p133, %p134
      %s137 = sadd.s32 %s136, 1
      %p140 = scmp.eq.s32.totalorder %s20, 1
      %p141 = scmp.ne.s32.totalorder %s136, %s138
      %p142 = scmp.eq.s32.totalorder %s20, 0
      %p143 = por %p141, %p142
      %p144 = scmp.ne.s32.totalorder %s136, %s138
      %p145 = scmp.eq.s32.totalorder %s25, 1
      %p146 = por %p144, %p145
      %p147 = scmp.ne.s32.totalorder %s138, %s139
      %p148 = scmp.eq.s32.totalorder %s25, 0
      %p149 = por %p147, %p148
      %p150 = scmp.ne.s32.totalorder %s138, %s139
      %p151 = scmp.eq.s32.totalorder %s26, 1
      %p152 = por %p150, %p151
      %p154 = scmp.ne.s32.totalorder %s139, %s153
      %p155 = scmp.eq.s32.totalorder %s26, 0
      %p156 = por %p154, %p155
      %s158 = sadd.s32 %s157, 1
      %p161 = scmp.eq.s32.totalorder %s20, 1
      %p162 = scmp.ne.s32.totalorder %s157, %s159
      %p163 = scmp.eq.s32.totalorder %s20, 0
      %p164 = por %p162, %p163
      %p165 = scmp.ne.s32.totalorder %s157, %s159
      %p166 = scmp.eq.s32.totalorder %s25, 1
      %p167 = por %p165, %p166
      %p168 = scmp.ne.s32.totalorder %s159, %s160
      %p169 = scmp.eq.s32.totalorder %s25, 0
      %p170 = por %p168, %p169
      %p171 = scmp.ne.s32.totalorder %s159, %s160
      %p172 = scmp.eq.s32.totalorder %s26, 1
      %p173 = por %p171, %p172
      %p175 = scmp.ne.s32.totalorder %s160, %s174
      %p176 = scmp.eq.s32.totalorder %s26, 0
      %p177 = por %p175, %p176
      %s178 = ssub.s32 %s27, %s39
      %s179 = ssub.s32 %s28, %s35
      %s180 = sor.u32 %s178, %s179
      %p181 = scmp.eq.s32.totalorder %s180, 0
      %s183 = sadd.s32 %s182, 1
      %s184 = scalar_select %p181, %s182, %s183
      %p187 = pneg %p181
      %p188 = scmp.eq.s32.totalorder %s20, 1
      %p189 = por %p187, %p188
      %p190 = scmp.ne.s32.totalorder %s182, %s185
      %p191 = scmp.eq.s32.totalorder %s20, 0
      %p192 = por %p190, %p191
      %p193 = scmp.ne.s32.totalorder %s182, %s185
      %p194 = scmp.eq.s32.totalorder %s25, 1
      %p195 = por %p193, %p194
      %p196 = scmp.ne.s32.totalorder %s185, %s186
      %p197 = scmp.eq.s32.totalorder %s25, 0
      %p198 = por %p196, %p197
      %p199 = scmp.ne.s32.totalorder %s185, %s186
      %p200 = scmp.eq.s32.totalorder %s26, 1
      %p201 = por %p199, %p200
      %p203 = scmp.ne.s32.totalorder %s186, %s202
      %p204 = scmp.eq.s32.totalorder %s26, 0
      %p205 = por %p203, %p204
      %p206 = scmp.le.s32.totalorder 1, %s20
      %p207 = scmp.lt.s32.totalorder %s20, 3
      %p208 = pnand %p206, %p207
      %p209 = pneg %p208
      // Predicated region
      $region9: #{graph_cnn_layer2.1} parent=5 // pred_check
        _
      $region10: #{graph_cnn_layer2.1} parent=5 // pred_check_branch
        %211 = sbr.rel (%p208) target = $region12
      $region11: #{graph_cnn_layer2.1} parent=5 // pred_region
        %s212 = ssub.s32 %s20, 1
        // Predicated region
        $region13: #{graph_cnn_layer2.1} parent=11 // pred_check
          %p213 = pneg %p79
        $region14: #{graph_cnn_layer2.1} parent=11 // pred_check_branch
          %215 = sbr.rel (%p213) target = $region16
        $region15: #{graph_cnn_layer2.1} parent=11 // pred_region
          _
        $region16: #{graph_cnn_layer2.1} parent=11 // pred_fallthru
          _
        // Predicated region
        $region17: #{graph_cnn_layer2.1} parent=11 // pred_check
          %p216 = pneg %p100
        $region18: #{graph_cnn_layer2.1} parent=11 // pred_check_branch
          %218 = sbr.rel (%p216) target = $region20
        $region19: #{graph_cnn_layer2.1} parent=11 // pred_region
          _
        $region20: #{graph_cnn_layer2.1} parent=11 // pred_fallthru
          _
        // Predicated region
        $region21: #{graph_cnn_layer2.1} parent=11 // pred_check
          %p219 = pneg %p149
        $region22: #{graph_cnn_layer2.1} parent=11 // pred_check_branch
          %221 = sbr.rel (%p219) target = $region24
        $region23: #{graph_cnn_layer2.1} parent=11 // pred_region
          %s223 = ssub.s32 64, 64
          %224 = vsyncadd [#allocation5], %s223
          %s226 = sshll.u32 %s4, 4
          %s227 = int_to_ptr.vmem [resolvable:$true] %s226
          %229 = dma.vmem_to_smem %s227, 64, [#allocation6], [#allocation5]
        $region24: #{graph_cnn_layer2.1} parent=11 // pred_fallthru
          _
        // Predicated region
        $region25: #{graph_cnn_layer2.1} parent=11 // pred_check
          %p230 = pneg %p170
        $region26: #{graph_cnn_layer2.1} parent=11 // pred_check_branch
          %232 = sbr.rel (%p230) target = $region28
        $region27: #{graph_cnn_layer2.1} parent=11 // pred_region
          %s234 = ssub.s32 16, 16
          %235 = vsyncadd [#allocation8], %s234
          %s237 = sshll.u32 %s5, 4
          %s238 = int_to_ptr.vmem [resolvable:$true] %s237
          %240 = dma.vmem_to_smem %s238, 16, [#allocation7], [#allocation8]
        $region28: #{graph_cnn_layer2.1} parent=11 // pred_fallthru
          _
      $region12: #{graph_cnn_layer2.1} parent=5 // pred_fallthru
        _
      %p241 = scmp.lt.s32.totalorder %s20, 2
      // Predicated region
      $region29: #{graph_cnn_layer2.1} parent=5 // pred_check
        %p242 = pneg %p241
      $region30: #{graph_cnn_layer2.1} parent=5 // pred_check_branch
        %244 = sbr.rel (%p242) target = $region32
      $region31: #{graph_cnn_layer2.1} parent=5 // pred_region
        // Predicated region
        $region33: #{graph_cnn_layer2.1} parent=31 // pred_check
          %p245 = pneg %p52
        $region34: #{graph_cnn_layer2.1} parent=31 // pred_check_branch
          %247 = sbr.rel (%p245) target = $region36
        $region35: #{graph_cnn_layer2.1} parent=31 // pred_region
          %p248 = scmp.lt.s32.totalorder %s27, 1
          %s249 = scalar_select %p248, %s27, 1
          %s250 = smul.addr %s249, 2
          %s251 = smul.addr %s250, 8
          %s252 = scalar_lea.vmem %s0, %s251
        $region36: #{graph_cnn_layer2.1} parent=31 // pred_fallthru
          _
        // Predicated region
        $region37: #{graph_cnn_layer2.1} parent=31 // pred_check
          %p253 = pneg %p122
        $region38: #{graph_cnn_layer2.1} parent=31 // pred_check_branch
          %255 = sbr.rel (%p253) target = $region40
        $region39: #{graph_cnn_layer2.1} parent=31 // pred_region
          %s256 = sand.u32 %s112, 1
          %s257 = scalar_lea.sflag [#allocation3], %s256
          %s258 = sand.u32 %s112, 1
          %s259 = smul.addr %s258, 64
          %s260 = scalar_lea.vmem [#allocation2], %s259
          %s261 = smul.u32 16, %s28
          %s263 = ssub.s32 1024, 1024
          %264 = vsyncadd %s257, %s263
          %s265 = smul.addr %s27, 16
          %s266 = sadd.s32 %s261, %s265
          %s267 = smul.addr %s266, 64
          %s268 = scalar_lea.hbm %s3, %s267
          %s269 = sshll.u32 %s260, 4
          %s270 = int_to_ptr.vmem [resolvable:$true] %s269
          %275 = dma.hbm_to_vmem [thread:$0]  %s268, 1024, %s270, %s257, 64, 64, 4
        $region40: #{graph_cnn_layer2.1} parent=31 // pred_fallthru
          _
      $region32: #{graph_cnn_layer2.1} parent=5 // pred_fallthru
        _
      %p276 = scmp.le.s32.totalorder 1, %s20
      %p277 = scmp.lt.s32.totalorder %s20, 3
      %p278 = pnand %p276, %p277
      %p279 = pneg %p278
      // Predicated region
      $region41: #{graph_cnn_layer2.1} parent=5 // pred_check
        _
      $region42: #{graph_cnn_layer2.1} parent=5 // pred_check_branch
        %281 = sbr.rel (%p278) target = $region44
      $region43: #{graph_cnn_layer2.1} parent=5 // pred_region
        %s282 = ssub.s32 %s20, 1
        %s283 = sand.u32 %s115, 1
        %s284 = scalar_lea.sflag [#allocation3], %s283
        %s285 = sand.u32 %s115, 1
        %s286 = smul.addr %s285, 64
        %s287 = scalar_lea.vmem [#allocation2], %s286
        // Predicated region
        $region45: #{graph_cnn_layer2.1} parent=43 // pred_check
          %p288 = pneg %p128
        $region46: #{graph_cnn_layer2.1} parent=43 // pred_check_branch
          %290 = sbr.rel (%p288) target = $region48
        $region47: #{graph_cnn_layer2.1} parent=43 // pred_region
          %291 = dma.done %s284, 1024
        $region48: #{graph_cnn_layer2.1} parent=43 // pred_fallthru
          _
        // Predicated region
        $region49: #{graph_cnn_layer2.1} parent=43 // pred_check
          %p292 = pneg %p149
        $region50: #{graph_cnn_layer2.1} parent=43 // pred_check_branch
          %294 = sbr.rel (%p292) target = $region52
        $region51: #{graph_cnn_layer2.1} parent=43 // pred_region
          %295 = dma.done [#allocation5], 64
        $region52: #{graph_cnn_layer2.1} parent=43 // pred_fallthru
          _
        // Predicated region
        $region53: #{graph_cnn_layer2.1} parent=43 // pred_check
          %p296 = pneg %p170
        $region54: #{graph_cnn_layer2.1} parent=43 // pred_check_branch
          %298 = sbr.rel (%p296) target = $region56
        $region55: #{graph_cnn_layer2.1} parent=43 // pred_region
          %299 = dma.done [#allocation8], 16
        $region56: #{graph_cnn_layer2.1} parent=43 // pred_fallthru
          _
        %300 = sfence
        %p301 = scmp.lt.s32.totalorder %s29, 1
        %s302 = scalar_select %p301, %s29, 1
        %s303 = smul.addr %s302, 2
        %s304 = smul.addr %s303, 8
        %s305 = scalar_lea.vmem %s0, %s304
        %p306 = pneg %p58
        %p307 = pneg %p55
        %p308 = pneg %p79
        %p309 = pneg %p76
        %p310 = pneg %p100
        %p311 = pneg %p97
        %s312 = sand.u32 %s115, 1
        %s313 = scalar_lea.sflag [#allocation3], %s312
        %s314 = sand.u32 %s115, 1
        %s315 = smul.addr %s314, 64
        %s316 = scalar_lea.vmem [#allocation2], %s315
        %p317 = pneg %p128
        %p318 = pneg %p125
        %p319 = pneg %p149
        %p320 = pneg %p146
        %p321 = pneg %p170
        %p322 = pneg %p167
        %p323 = pneg %p198
        %p324 = pneg %p195
        %s325 = sand.u32 %s185, 1
        %s326 = scalar_lea.sflag [#allocation4], %s325
        %s327 = sand.u32 %s185, 1
        %s328 = smul.addr %s327, 64
        %s329 = scalar_lea.vmem [#allocation9], %s328
        %p330 = scmp.lt.s32.totalorder %s29, 1
        %s331 = scalar_select %p330, %s29, 1
        %s332 = smul.addr %s331, 2
        %s333 = smul.addr %s332, 8
        %s334 = scalar_lea.vmem %s0, %s333
        %s335 = smul.u32 16, %s30
        %s336 = smul.u32 16, %s30
        %v337 = vld [vmem:[%s334] sm:$0xff]
        %v338 = vld [vmem:[%s334 + $0x8] sm:$0xff]
        %v339 = vld [vmem:[%s1] sm:$0xf]
        %vm340 = vcmask 64512
        %v342 = vsel %vm340, %v339, 0
        %v345 = vsel %vm340, %v337, 0
        %v348 = vsel %vm340, %v338, 0
        %350 = vmatprep.subr.mxu0 0.0
        %351 = vmatpush1.xpose.msra.mxu0 0.0
        %352 = vmatprep.subr.mxu0 0.0
        %353 = vmatpush1.xpose.msra.mxu0 0.0
        %354 = vmatprep.subr.mxu0 0.0
        %355 = vmatpush1.xpose.msra.mxu0 0.0
        %356 = vmatprep.subr.mxu0 0.0
        %357 = vmatpush1.xpose.msra.mxu0 0.0
        %358 = vmatprep.subr.mxu0 0.0
        %359 = vmatpush1.xpose.msra.mxu0 0.0
        %360 = vmatprep.subr.mxu0 0.0
        %361 = vmatpush1.xpose.msra.mxu0 0.0
        %362 = vmatprep.subr.mxu0 0.0
        %363 = vmatpush1.xpose.msra.mxu0 0.0
        %364 = vmatprep.subr.mxu0 0.0
        %365 = vmatpush1.xpose.msra.mxu0 0.0
        %366 = vmatprep.subr.mxu0 0.0
        %367 = vmatpush1.xpose.msra.mxu0 0.0
        %368 = vmatprep.subr.mxu0 0.0
        %369 = vmatpush1.xpose.msra.mxu0 0.0
        %370 = vmatprep.subr.mxu0 0.0
        %371 = vmatpush1.xpose.msra.mxu0 0.0
        %372 = vmatprep.subr.mxu0 0.0
        %373 = vmatpush1.xpose.msra.mxu0 0.0
        %374 = vmatprep.subr.mxu0 0.0
        %375 = vmatpush1.xpose.msra.mxu0 0.0
        %376 = vmatprep.subr.mxu0 0.0
        %377 = vmatpush1.xpose.msra.mxu0 0.0
        %378 = vmatprep.subr.mxu0 0.0
        %379 = vmatpush1.xpose.msra.mxu0 %v348
        %380 = vmatprep.subr.mxu0 0.0
        %381 = vmatpush1.xpose.msra.mxu0 %v345
        %382 = vmatprep.subr.mxu0 0.0
        %383 = vmatpush2.xpose.msra.mxu0 0.0
        %384 = vmatprep.subr.mxu0 0.0
        %385 = vmatpush2.xpose.msra.mxu0 0.0
        %386 = vmatprep.subr.mxu0 0.0
        %387 = vmatpush2.xpose.msra.mxu0 0.0
        %388 = vmatprep.subr.mxu0 0.0
        %389 = vmatpush2.xpose.msra.mxu0 0.0
        %390 = vmatprep.subr.mxu0 0.0
        %391 = vmatpush2.xpose.msra.mxu0 0.0
        %392 = vmatprep.subr.mxu0 0.0
        %393 = vmatpush2.xpose.msra.mxu0 0.0
        %394 = vmatprep.subr.mxu0 0.0
        %395 = vmatpush2.xpose.msra.mxu0 0.0
        %396 = vmatprep.subr.mxu0 0.0
        %397 = vmatpush2.xpose.msra.mxu0 0.0
        %398 = vmatprep.subr.mxu0 0.0
        %399 = vmatpush2.xpose.msra.mxu0 0.0
        %400 = vmatprep.subr.mxu0 0.0
        %401 = vmatpush2.xpose.msra.mxu0 0.0
        %402 = vmatprep.subr.mxu0 0.0
        %403 = vmatpush2.xpose.msra.mxu0 0.0
        %404 = vmatprep.subr.mxu0 0.0
        %405 = vmatpush2.xpose.msra.mxu0 0.0
        %406 = vmatprep.subr.mxu0 0.0
        %407 = vmatpush2.xpose.msra.mxu0 0.0
        %408 = vmatprep.subr.mxu0 0.0
        %409 = vmatpush2.xpose.msra.mxu0 0.0
        %410 = vmatprep.subr.mxu0 0.0
        %411 = vmatpush2.xpose.msra.mxu0 0.0
        %412 = vmatprep.subr.mxu0 0.0
        %413 = vmatpush2.xpose.msra.mxu0 0.0
        %414 = vmatprep.mubr.f32.mxu0 0.0
        %415 = vmatmul.mubr.f32.gmra.mxu0 %v342
        %v416 = vpop.f32.mrf.mxu0
        %v417 = vadd.f32 0.0, %v416
        %v418 = vpop.f32.mrf.mxu0
        %419 = vdwg.mxu0
        %v420 = vld [vmem:[%s2] sm:$0xf]
        %v422 = vsel %vm340, %v420, 0
        %424 = vmatprep.subr.mxu0 0.0
        %425 = vmatpush1.xpose.msra.mxu0 0.0
        %426 = vmatprep.subr.mxu0 0.0
        %427 = vmatpush1.xpose.msra.mxu0 0.0
        %428 = vmatprep.subr.mxu0 0.0
        %429 = vmatpush1.xpose.msra.mxu0 0.0
        %430 = vmatprep.subr.mxu0 0.0
        %431 = vmatpush1.xpose.msra.mxu0 0.0
        %432 = vmatprep.subr.mxu0 0.0
        %433 = vmatpush1.xpose.msra.mxu0 0.0
        %434 = vmatprep.subr.mxu0 0.0
        %435 = vmatpush1.xpose.msra.mxu0 0.0
        %436 = vmatprep.subr.mxu0 0.0
        %437 = vmatpush1.xpose.msra.mxu0 0.0
        %438 = vmatprep.subr.mxu0 0.0
        %439 = vmatpush1.xpose.msra.mxu0 0.0
        %440 = vmatprep.subr.mxu0 0.0
        %441 = vmatpush1.xpose.msra.mxu0 0.0
        %442 = vmatprep.subr.mxu0 0.0
        %443 = vmatpush1.xpose.msra.mxu0 0.0
        %444 = vmatprep.subr.mxu0 0.0
        %445 = vmatpush1.xpose.msra.mxu0 0.0
        %446 = vmatprep.subr.mxu0 0.0
        %447 = vmatpush1.xpose.msra.mxu0 0.0
        %448 = vmatprep.subr.mxu0 0.0
        %449 = vmatpush1.xpose.msra.mxu0 0.0
        %450 = vmatprep.subr.mxu0 0.0
        %451 = vmatpush1.xpose.msra.mxu0 0.0
        %452 = vmatprep.subr.mxu0 0.0
        %453 = vmatpush1.xpose.msra.mxu0 0.0
        %454 = vmatprep.subr.mxu0 0.0
        %455 = vmatpush1.xpose.msra.mxu0 %v422
        %456 = vmatprep.subr.mxu0 0.0
        %457 = vmatpush2.xpose.msra.mxu0 0.0
        %458 = vmatprep.subr.mxu0 0.0
        %459 = vmatpush2.xpose.msra.mxu0 0.0
        %460 = vmatprep.subr.mxu0 0.0
        %461 = vmatpush2.xpose.msra.mxu0 0.0
        %462 = vmatprep.subr.mxu0 0.0
        %463 = vmatpush2.xpose.msra.mxu0 0.0
        %464 = vmatprep.subr.mxu0 0.0
        %465 = vmatpush2.xpose.msra.mxu0 0.0
        %466 = vmatprep.subr.mxu0 0.0
        %467 = vmatpush2.xpose.msra.mxu0 0.0
        %468 = vmatprep.subr.mxu0 0.0
        %469 = vmatpush2.xpose.msra.mxu0 0.0
        %470 = vmatprep.subr.mxu0 0.0
        %471 = vmatpush2.xpose.msra.mxu0 0.0
        %472 = vmatprep.subr.mxu0 0.0
        %473 = vmatpush2.xpose.msra.mxu0 0.0
        %474 = vmatprep.subr.mxu0 0.0
        %475 = vmatpush2.xpose.msra.mxu0 0.0
        %476 = vmatprep.subr.mxu0 0.0
        %477 = vmatpush2.xpose.msra.mxu0 0.0
        %478 = vmatprep.subr.mxu0 0.0
        %479 = vmatpush2.xpose.msra.mxu0 0.0
        %480 = vmatprep.subr.mxu0 0.0
        %481 = vmatpush2.xpose.msra.mxu0 0.0
        %482 = vmatprep.subr.mxu0 0.0
        %483 = vmatpush2.xpose.msra.mxu0 0.0
        %484 = vmatprep.subr.mxu0 0.0
        %485 = vmatpush2.xpose.msra.mxu0 0.0
        %486 = vmatprep.subr.mxu0 0.0
        %487 = vmatpush2.xpose.msra.mxu0 0.0
        %488 = vmatprep.mubr.f32.mxu0 0.0
        %489 = vmatmul.mubr.f32.gmra.mxu0 %v345
        %v490 = vpop.f32.mrf.mxu0
        %v491 = vadd.f32 0.0, %v490
        %v492 = vpop.f32.mrf.mxu0
        %493 = vmatprep.mubr.f32.mxu0 0.0
        %494 = vmatmul.mubr.f32.gmra.mxu0 %v348
        %v495 = vpop.f32.mrf.mxu0
        %v496 = vadd.f32 0.0, %v495
        %v497 = vpop.f32.mrf.mxu0
        %498 = vdwg.mxu0
        %v499 = vld [vmem:[%s287] sm:$0x1]
        %v500 = vld [vmem:[%s287 + $0x4] sm:$0x1]
        %v501 = vld [vmem:[%s287 + $0x8] sm:$0x1]
        %v502 = vld [vmem:[%s287 + $0xc] sm:$0x1]
        %v503 = vld [vmem:[%s287 + $0x10] sm:$0x1]
        %v504 = vld [vmem:[%s287 + $0x14] sm:$0x1]
        %v505 = vld [vmem:[%s287 + $0x18] sm:$0x1]
        %v506 = vld [vmem:[%s287 + $0x1c] sm:$0x1]
        %v507 = vld [vmem:[%s287 + $0x20] sm:$0x1]
        %v508 = vld [vmem:[%s287 + $0x24] sm:$0x1]
        %v509 = vld [vmem:[%s287 + $0x28] sm:$0x1]
        %v510 = vld [vmem:[%s287 + $0x2c] sm:$0x1]
        %v511 = vld [vmem:[%s287 + $0x30] sm:$0x1]
        %v512 = vld [vmem:[%s287 + $0x34] sm:$0x1]
        %v513 = vld [vmem:[%s287 + $0x38] sm:$0x1]
        %v514 = vld [vmem:[%s287 + $0x3c] sm:$0x1]
        %v515 = vld [vmem:[%s287 + $0x1] sm:$0x1]
        %v516 = vld [vmem:[%s287 + $0x5] sm:$0x1]
        %v517 = vld [vmem:[%s287 + $0x9] sm:$0x1]
        %v518 = vld [vmem:[%s287 + $0xd] sm:$0x1]
        %v519 = vld [vmem:[%s287 + $0x11] sm:$0x1]
        %v520 = vld [vmem:[%s287 + $0x15] sm:$0x1]
        %v521 = vld [vmem:[%s287 + $0x19] sm:$0x1]
        %v522 = vld [vmem:[%s287 + $0x1d] sm:$0x1]
        %v523 = vld [vmem:[%s287 + $0x21] sm:$0x1]
        %v524 = vld [vmem:[%s287 + $0x25] sm:$0x1]
        %v525 = vld [vmem:[%s287 + $0x29] sm:$0x1]
        %v526 = vld [vmem:[%s287 + $0x2d] sm:$0x1]
        %v527 = vld [vmem:[%s287 + $0x31] sm:$0x1]
        %v528 = vld [vmem:[%s287 + $0x35] sm:$0x1]
        %v529 = vld [vmem:[%s287 + $0x39] sm:$0x1]
        %v530 = vld [vmem:[%s287 + $0x3d] sm:$0x1]
        %v531 = vld [vmem:[%s287 + $0x2] sm:$0x1]
        %v532 = vld [vmem:[%s287 + $0x6] sm:$0x1]
        %v533 = vld [vmem:[%s287 + $0xa] sm:$0x1]
        %v534 = vld [vmem:[%s287 + $0xe] sm:$0x1]
        %v535 = vld [vmem:[%s287 + $0x12] sm:$0x1]
        %v536 = vld [vmem:[%s287 + $0x16] sm:$0x1]
        %v537 = vld [vmem:[%s287 + $0x1a] sm:$0x1]
        %v538 = vld [vmem:[%s287 + $0x1e] sm:$0x1]
        %v539 = vld [vmem:[%s287 + $0x22] sm:$0x1]
        %v540 = vld [vmem:[%s287 + $0x26] sm:$0x1]
        %v541 = vld [vmem:[%s287 + $0x2a] sm:$0x1]
        %v542 = vld [vmem:[%s287 + $0x2e] sm:$0x1]
        %v543 = vld [vmem:[%s287 + $0x32] sm:$0x1]
        %v544 = vld [vmem:[%s287 + $0x36] sm:$0x1]
        %v545 = vld [vmem:[%s287 + $0x3a] sm:$0x1]
        %v546 = vld [vmem:[%s287 + $0x3e] sm:$0x1]
        %v547 = vld [vmem:[%s287 + $0x3] sm:$0x1]
        %v548 = vld [vmem:[%s287 + $0x7] sm:$0x1]
        %v549 = vld [vmem:[%s287 + $0xb] sm:$0x1]
        %v550 = vld [vmem:[%s287 + $0xf] sm:$0x1]
        %v551 = vld [vmem:[%s287 + $0x13] sm:$0x1]
        %v552 = vld [vmem:[%s287 + $0x17] sm:$0x1]
        %v553 = vld [vmem:[%s287 + $0x1b] sm:$0x1]
        %v554 = vld [vmem:[%s287 + $0x1f] sm:$0x1]
        %v555 = vld [vmem:[%s287 + $0x23] sm:$0x1]
        %v556 = vld [vmem:[%s287 + $0x27] sm:$0x1]
        %v557 = vld [vmem:[%s287 + $0x2b] sm:$0x1]
        %v558 = vld [vmem:[%s287 + $0x2f] sm:$0x1]
        %v559 = vld [vmem:[%s287 + $0x33] sm:$0x1]
        %v560 = vld [vmem:[%s287 + $0x37] sm:$0x1]
        %v561 = vld [vmem:[%s287 + $0x3b] sm:$0x1]
        %v562 = vld [vmem:[%s287 + $0x3f] sm:$0x1]
        %s563 = sld [smem:[#allocation7]]
        %v564 = vstv %s563
        %v565 = vadd.f32 %v417, %v564
        %567 = vset.pattern.permute.xlu0 0
        %568 = vperm.xlu0 %567, %v491
        %v569 = vpop.permute.xlu0 %568
        %572 = vset.pattern.permute.xlu0 0
        %573 = vperm.xlu0 %572, %v496
        %v574 = vpop.permute.xlu0 %573
        %v576 = vlaneseq
        %v577 = vshrl.u32 %v576, 7
        %v578 = vsub.s32 0, %v577
        %v579 = vrot.slane %v565, %v578
        %v580 = vadd.f32 %v569, %v579
        %v581 = vadd.f32 %v574, %v579
        %s582 = sld [smem:[#allocation6]]
        %v583 = vstv %s582
        %v584 = vmul.f32 %v583, %v499
        %v585 = vmul.f32 %v583, %v500
        %v586 = vmul.f32 %v583, %v501
        %v587 = vmul.f32 %v583, %v502
        %v588 = vmul.f32 %v583, %v503
        %v589 = vmul.f32 %v583, %v504
        %v590 = vmul.f32 %v583, %v505
        %v591 = vmul.f32 %v583, %v506
        %v592 = vmul.f32 %v583, %v507
        %v593 = vmul.f32 %v583, %v508
        %v594 = vmul.f32 %v583, %v509
        %v595 = vmul.f32 %v583, %v510
        %v596 = vmul.f32 %v583, %v511
        %v597 = vmul.f32 %v583, %v512
        %v598 = vmul.f32 %v583, %v513
        %v599 = vmul.f32 %v583, %v514
        %v616 = vrot.slane %v585, 7
        %vm617 = vcmask 1041409
        %v618 = vsel %vm617, %v616, %v584
        %v619 = vrot.slane %v586, 6
        %vm620 = vcmask 1042434
        %v621 = vsel %vm620, %v619, %v618
        %v622 = vrot.slane %v587, 5
        %vm623 = vcmask 1043459
        %v624 = vsel %vm623, %v622, %v621
        %v625 = vrot.slane %v588, 4
        %vm626 = vcmask 1044484
        %v627 = vsel %vm626, %v625, %v624
        %v628 = vrot.slane %v589, 3
        %vm629 = vcmask 1045509
        %v630 = vsel %vm629, %v628, %v627
        %v631 = vrot.slane %v590, 2
        %vm632 = vcmask 1046534
        %v633 = vsel %vm632, %v631, %v630
        %v634 = vrot.slane %v591, 1
        %vm635 = vcmask 1047559
        %v636 = vsel %vm635, %v634, %v633
        %v637 = vrot.slane %v593, 7
        %v638 = vsel %vm617, %v637, %v592
        %v639 = vrot.slane %v594, 6
        %v640 = vsel %vm620, %v639, %v638
        %v641 = vrot.slane %v595, 5
        %v642 = vsel %vm623, %v641, %v640
        %v643 = vrot.slane %v596, 4
        %v644 = vsel %vm626, %v643, %v642
        %v645 = vrot.slane %v597, 3
        %v646 = vsel %vm629, %v645, %v644
        %v647 = vrot.slane %v598, 2
        %v648 = vsel %vm632, %v647, %v646
        %v649 = vrot.slane %v599, 1
        %v650 = vsel %vm635, %v649, %v648
        %v653 = vadd.f32 %v580, %v636
        %v654 = vadd.f32 %v581, %v650
        %s655 = sld [smem:[#allocation6 + $0x1]]
        %v656 = vstv %s655
        %v657 = vmul.f32 %v656, %v515
        %v658 = vmul.f32 %v656, %v516
        %v659 = vmul.f32 %v656, %v517
        %v660 = vmul.f32 %v656, %v518
        %v661 = vmul.f32 %v656, %v519
        %v662 = vmul.f32 %v656, %v520
        %v663 = vmul.f32 %v656, %v521
        %v664 = vmul.f32 %v656, %v522
        %v665 = vmul.f32 %v656, %v523
        %v666 = vmul.f32 %v656, %v524
        %v667 = vmul.f32 %v656, %v525
        %v668 = vmul.f32 %v656, %v526
        %v669 = vmul.f32 %v656, %v527
        %v670 = vmul.f32 %v656, %v528
        %v671 = vmul.f32 %v656, %v529
        %v672 = vmul.f32 %v656, %v530
        %v689 = vrot.slane %v658, 7
        %v690 = vsel %vm617, %v689, %v657
        %v691 = vrot.slane %v659, 6
        %v692 = vsel %vm620, %v691, %v690
        %v693 = vrot.slane %v660, 5
        %v694 = vsel %vm623, %v693, %v692
        %v695 = vrot.slane %v661, 4
        %v696 = vsel %vm626, %v695, %v694
        %v697 = vrot.slane %v662, 3
        %v698 = vsel %vm629, %v697, %v696
        %v699 = vrot.slane %v663, 2
        %v700 = vsel %vm632, %v699, %v698
        %v701 = vrot.slane %v664, 1
        %v702 = vsel %vm635, %v701, %v700
        %v703 = vrot.slane %v666, 7
        %v704 = vsel %vm617, %v703, %v665
        %v705 = vrot.slane %v667, 6
        %v706 = vsel %vm620, %v705, %v704
        %v707 = vrot.slane %v668, 5
        %v708 = vsel %vm623, %v707, %v706
        %v709 = vrot.slane %v669, 4
        %v710 = vsel %vm626, %v709, %v708
        %v711 = vrot.slane %v670, 3
        %v712 = vsel %vm629, %v711, %v710
        %v713 = vrot.slane %v671, 2
        %v714 = vsel %vm632, %v713, %v712
        %v715 = vrot.slane %v672, 1
        %v716 = vsel %vm635, %v715, %v714
        %v719 = vadd.f32 %v653, %v702
        %v720 = vadd.f32 %v654, %v716
        %s721 = sld [smem:[#allocation6 + $0x2]]
        %v722 = vstv %s721
        %v723 = vmul.f32 %v722, %v531
        %v724 = vmul.f32 %v722, %v532
        %v725 = vmul.f32 %v722, %v533
        %v726 = vmul.f32 %v722, %v534
        %v727 = vmul.f32 %v722, %v535
        %v728 = vmul.f32 %v722, %v536
        %v729 = vmul.f32 %v722, %v537
        %v730 = vmul.f32 %v722, %v538
        %v731 = vmul.f32 %v722, %v539
        %v732 = vmul.f32 %v722, %v540
        %v733 = vmul.f32 %v722, %v541
        %v734 = vmul.f32 %v722, %v542
        %v735 = vmul.f32 %v722, %v543
        %v736 = vmul.f32 %v722, %v544
        %v737 = vmul.f32 %v722, %v545
        %v738 = vmul.f32 %v722, %v546
        %v755 = vrot.slane %v724, 7
        %v756 = vsel %vm617, %v755, %v723
        %v757 = vrot.slane %v725, 6
        %v758 = vsel %vm620, %v757, %v756
        %v759 = vrot.slane %v726, 5
        %v760 = vsel %vm623, %v759, %v758
        %v761 = vrot.slane %v727, 4
        %v762 = vsel %vm626, %v761, %v760
        %v763 = vrot.slane %v728, 3
        %v764 = vsel %vm629, %v763, %v762
        %v765 = vrot.slane %v729, 2
        %v766 = vsel %vm632, %v765, %v764
        %v767 = vrot.slane %v730, 1
        %v768 = vsel %vm635, %v767, %v766
        %v769 = vrot.slane %v732, 7
        %v770 = vsel %vm617, %v769, %v731
        %v771 = vrot.slane %v733, 6
        %v772 = vsel %vm620, %v771, %v770
        %v773 = vrot.slane %v734, 5
        %v774 = vsel %vm623, %v773, %v772
        %v775 = vrot.slane %v735, 4
        %v776 = vsel %vm626, %v775, %v774
        %v777 = vrot.slane %v736, 3
        %v778 = vsel %vm629, %v777, %v776
        %v779 = vrot.slane %v737, 2
        %v780 = vsel %vm632, %v779, %v778
        %v781 = vrot.slane %v738, 1
        %v782 = vsel %vm635, %v781, %v780
        %v785 = vadd.f32 %v719, %v768
        %v786 = vadd.f32 %v720, %v782
        %s787 = sld [smem:[#allocation6 + $0x3]]
        %v788 = vstv %s787
        %v789 = vmul.f32 %v788, %v547
        %v790 = vmul.f32 %v788, %v548
        %v791 = vmul.f32 %v788, %v549
        %v792 = vmul.f32 %v788, %v550
        %v793 = vmul.f32 %v788, %v551
        %v794 = vmul.f32 %v788, %v552
        %v795 = vmul.f32 %v788, %v553
        %v796 = vmul.f32 %v788, %v554
        %v797 = vmul.f32 %v788, %v555
        %v798 = vmul.f32 %v788, %v556
        %v799 = vmul.f32 %v788, %v557
        %v800 = vmul.f32 %v788, %v558
        %v801 = vmul.f32 %v788, %v559
        %v802 = vmul.f32 %v788, %v560
        %v803 = vmul.f32 %v788, %v561
        %v804 = vmul.f32 %v788, %v562
        %v821 = vrot.slane %v790, 7
        %v822 = vsel %vm617, %v821, %v789
        %v823 = vrot.slane %v791, 6
        %v824 = vsel %vm620, %v823, %v822
        %v825 = vrot.slane %v792, 5
        %v826 = vsel %vm623, %v825, %v824
        %v827 = vrot.slane %v793, 4
        %v828 = vsel %vm626, %v827, %v826
        %v829 = vrot.slane %v794, 3
        %v830 = vsel %vm629, %v829, %v828
        %v831 = vrot.slane %v795, 2
        %v832 = vsel %vm632, %v831, %v830
        %v833 = vrot.slane %v796, 1
        %v834 = vsel %vm635, %v833, %v832
        %v835 = vrot.slane %v798, 7
        %v836 = vsel %vm617, %v835, %v797
        %v837 = vrot.slane %v799, 6
        %v838 = vsel %vm620, %v837, %v836
        %v839 = vrot.slane %v800, 5
        %v840 = vsel %vm623, %v839, %v838
        %v841 = vrot.slane %v801, 4
        %v842 = vsel %vm626, %v841, %v840
        %v843 = vrot.slane %v802, 3
        %v844 = vsel %vm629, %v843, %v842
        %v845 = vrot.slane %v803, 2
        %v846 = vsel %vm632, %v845, %v844
        %v847 = vrot.slane %v804, 1
        %v848 = vsel %vm635, %v847, %v846
        %v851 = vadd.f32 %v785, %v834
        %v852 = vadd.f32 %v786, %v848
        %v853 = vmax.f32 %v851, 0.0
        %v854 = vmax.f32 %v852, 0.0
        %v857 = vcombine.high %v853, %v853
        %v859 = vunpack.c.l.s4 1966171168
        %v860 = vunpack.c.0.s8 %v859
        %v861 = vlaneseq
        %v862 = vshrl.u32 %v861, 7
        %v863 = vsub.s32 %v860, %v862
        %v864 = vrot.slane %v853, %v863
        %v866 = vunpack.c.l.s4 1966171168
        %v867 = vunpack.c.0.s8 %v866
        %v868 = vlaneseq
        %v869 = vshrl.u32 %v868, 7
        %v870 = vsub.s32 %v867, %v869
        %v871 = vrot.slane %v857, %v870
        %v872 = vcombine.high %v864, %v864
        %v873 = vcombine.high %v871, %v871
        %v875 = vunpack.c.l.s4 1966171168
        %v876 = vunpack.c.0.s8 %v875
        %v877 = vlaneseq
        %v878 = vshrl.u32 %v877, 7
        %v879 = vsub.s32 %v876, %v878
        %v880 = vrot.slane %v864, %v879
        %v882 = vunpack.c.l.s4 1966171168
        %v883 = vunpack.c.0.s8 %v882
        %v884 = vlaneseq
        %v885 = vshrl.u32 %v884, 7
        %v886 = vsub.s32 %v883, %v885
        %v887 = vrot.slane %v871, %v886
        %v889 = vunpack.c.l.s4 1966171168
        %v890 = vunpack.c.0.s8 %v889
        %v891 = vlaneseq
        %v892 = vshrl.u32 %v891, 7
        %v893 = vsub.s32 %v890, %v892
        %v894 = vrot.slane %v872, %v893
        %v896 = vunpack.c.l.s4 1966171168
        %v897 = vunpack.c.0.s8 %v896
        %v898 = vlaneseq
        %v899 = vshrl.u32 %v898, 7
        %v900 = vsub.s32 %v897, %v899
        %v901 = vrot.slane %v873, %v900
        %v902 = vcombine.high %v880, %v880
        %v903 = vcombine.high %v887, %v887
        %v904 = vcombine.high %v894, %v894
        %v905 = vcombine.high %v901, %v901
        %v906 = vcombine.high %v854, %v854
        %v908 = vunpack.c.l.s4 1966171168
        %v909 = vunpack.c.0.s8 %v908
        %v910 = vlaneseq
        %v911 = vshrl.u32 %v910, 7
        %v912 = vsub.s32 %v909, %v911
        %v913 = vrot.slane %v854, %v912
        %v915 = vunpack.c.l.s4 1966171168
        %v916 = vunpack.c.0.s8 %v915
        %v917 = vlaneseq
        %v918 = vshrl.u32 %v917, 7
        %v919 = vsub.s32 %v916, %v918
        %v920 = vrot.slane %v906, %v919
        %v921 = vcombine.high %v913, %v913
        %v922 = vcombine.high %v920, %v920
        %v924 = vunpack.c.l.s4 1966171168
        %v925 = vunpack.c.0.s8 %v924
        %v926 = vlaneseq
        %v927 = vshrl.u32 %v926, 7
        %v928 = vsub.s32 %v925, %v927
        %v929 = vrot.slane %v913, %v928
        %v931 = vunpack.c.l.s4 1966171168
        %v932 = vunpack.c.0.s8 %v931
        %v933 = vlaneseq
        %v934 = vshrl.u32 %v933, 7
        %v935 = vsub.s32 %v932, %v934
        %v936 = vrot.slane %v920, %v935
        %v938 = vunpack.c.l.s4 1966171168
        %v939 = vunpack.c.0.s8 %v938
        %v940 = vlaneseq
        %v941 = vshrl.u32 %v940, 7
        %v942 = vsub.s32 %v939, %v941
        %v943 = vrot.slane %v921, %v942
        %v945 = vunpack.c.l.s4 1966171168
        %v946 = vunpack.c.0.s8 %v945
        %v947 = vlaneseq
        %v948 = vshrl.u32 %v947, 7
        %v949 = vsub.s32 %v946, %v948
        %v950 = vrot.slane %v922, %v949
        %v951 = vcombine.high %v929, %v929
        %v952 = vcombine.high %v936, %v936
        %v953 = vcombine.high %v943, %v943
        %v954 = vcombine.high %v950, %v950
        %vm971 = vcmask 122880
        %972 = vst.msk [vmem:[%s329] sm:$0x1] %vm971, %v880
        %973 = vst.msk [vmem:[%s329 + $0x4] sm:$0x1] %vm971, %v894
        %974 = vst.msk [vmem:[%s329 + $0x8] sm:$0x1] %vm971, %v902
        %975 = vst.msk [vmem:[%s329 + $0xc] sm:$0x1] %vm971, %v904
        %976 = vst.msk [vmem:[%s329 + $0x10] sm:$0x1] %vm971, %v887
        %977 = vst.msk [vmem:[%s329 + $0x14] sm:$0x1] %vm971, %v901
        %978 = vst.msk [vmem:[%s329 + $0x18] sm:$0x1] %vm971, %v903
        %979 = vst.msk [vmem:[%s329 + $0x1c] sm:$0x1] %vm971, %v905
        %980 = vst.msk [vmem:[%s329 + $0x20] sm:$0x1] %vm971, %v929
        %981 = vst.msk [vmem:[%s329 + $0x24] sm:$0x1] %vm971, %v943
        %982 = vst.msk [vmem:[%s329 + $0x28] sm:$0x1] %vm971, %v951
        %983 = vst.msk [vmem:[%s329 + $0x2c] sm:$0x1] %vm971, %v953
        %984 = vst.msk [vmem:[%s329 + $0x30] sm:$0x1] %vm971, %v936
        %985 = vst.msk [vmem:[%s329 + $0x34] sm:$0x1] %vm971, %v950
        %986 = vst.msk [vmem:[%s329 + $0x38] sm:$0x1] %vm971, %v952
        %987 = vst.msk [vmem:[%s329 + $0x3c] sm:$0x1] %vm971, %v954
        %s988 = sld [smem:[#allocation7 + $0x1]]
        %v989 = vstv %s988
        %v990 = vadd.f32 %v417, %v989
        %991 = vset.pattern.permute.xlu0 1
        %992 = vperm.xlu0 %991, %v491
        %v993 = vpop.permute.xlu0 %992
        %995 = vset.pattern.permute.xlu0 1
        %996 = vperm.xlu0 %995, %v496
        %v997 = vpop.permute.xlu0 %996
        %v999 = vlaneseq
        %v1000 = vshrl.u32 %v999, 7
        %v1001 = vsub.s32 1, %v1000
        %v1002 = vrot.slane %v990, %v1001
        %v1003 = vadd.f32 %v993, %v1002
        %v1004 = vadd.f32 %v997, %v1002
        %s1005 = sld [smem:[#allocation6 + $0x80]]
        %v1006 = vstv %s1005
        %v1007 = vmul.f32 %v1006, %v499
        %v1008 = vmul.f32 %v1006, %v500
        %v1009 = vmul.f32 %v1006, %v501
        %v1010 = vmul.f32 %v1006, %v502
        %v1011 = vmul.f32 %v1006, %v503
        %v1012 = vmul.f32 %v1006, %v504
        %v1013 = vmul.f32 %v1006, %v505
        %v1014 = vmul.f32 %v1006, %v506
        %v1015 = vmul.f32 %v1006, %v507
        %v1016 = vmul.f32 %v1006, %v508
        %v1017 = vmul.f32 %v1006, %v509
        %v1018 = vmul.f32 %v1006, %v510
        %v1019 = vmul.f32 %v1006, %v511
        %v1020 = vmul.f32 %v1006, %v512
        %v1021 = vmul.f32 %v1006, %v513
        %v1022 = vmul.f32 %v1006, %v514
        %v1039 = vrot.slane %v1008, 7
        %v1040 = vsel %vm617, %v1039, %v1007
        %v1041 = vrot.slane %v1009, 6
        %v1042 = vsel %vm620, %v1041, %v1040
        %v1043 = vrot.slane %v1010, 5
        %v1044 = vsel %vm623, %v1043, %v1042
        %v1045 = vrot.slane %v1011, 4
        %v1046 = vsel %vm626, %v1045, %v1044
        %v1047 = vrot.slane %v1012, 3
        %v1048 = vsel %vm629, %v1047, %v1046
        %v1049 = vrot.slane %v1013, 2
        %v1050 = vsel %vm632, %v1049, %v1048
        %v1051 = vrot.slane %v1014, 1
        %v1052 = vsel %vm635, %v1051, %v1050
        %v1053 = vrot.slane %v1016, 7
        %v1054 = vsel %vm617, %v1053, %v1015
        %v1055 = vrot.slane %v1017, 6
        %v1056 = vsel %vm620, %v1055, %v1054
        %v1057 = vrot.slane %v1018, 5
        %v1058 = vsel %vm623, %v1057, %v1056
        %v1059 = vrot.slane %v1019, 4
        %v1060 = vsel %vm626, %v1059, %v1058
        %v1061 = vrot.slane %v1020, 3
        %v1062 = vsel %vm629, %v1061, %v1060
        %v1063 = vrot.slane %v1021, 2
        %v1064 = vsel %vm632, %v1063, %v1062
        %v1065 = vrot.slane %v1022, 1
        %v1066 = vsel %vm635, %v1065, %v1064
        %v1069 = vadd.f32 %v1003, %v1052
        %v1070 = vadd.f32 %v1004, %v1066
        %s1071 = sld [smem:[#allocation6 + $0x81]]
        %v1072 = vstv %s1071
        %v1073 = vmul.f32 %v1072, %v515
        %v1074 = vmul.f32 %v1072, %v516
        %v1075 = vmul.f32 %v1072, %v517
        %v1076 = vmul.f32 %v1072, %v518
        %v1077 = vmul.f32 %v1072, %v519
        %v1078 = vmul.f32 %v1072, %v520
        %v1079 = vmul.f32 %v1072, %v521
        %v1080 = vmul.f32 %v1072, %v522
        %v1081 = vmul.f32 %v1072, %v523
        %v1082 = vmul.f32 %v1072, %v524
        %v1083 = vmul.f32 %v1072, %v525
        %v1084 = vmul.f32 %v1072, %v526
        %v1085 = vmul.f32 %v1072, %v527
        %v1086 = vmul.f32 %v1072, %v528
        %v1087 = vmul.f32 %v1072, %v529
        %v1088 = vmul.f32 %v1072, %v530
        %v1105 = vrot.slane %v1074, 7
        %v1106 = vsel %vm617, %v1105, %v1073
        %v1107 = vrot.slane %v1075, 6
        %v1108 = vsel %vm620, %v1107, %v1106
        %v1109 = vrot.slane %v1076, 5
        %v1110 = vsel %vm623, %v1109, %v1108
        %v1111 = vrot.slane %v1077, 4
        %v1112 = vsel %vm626, %v1111, %v1110
        %v1113 = vrot.slane %v1078, 3
        %v1114 = vsel %vm629, %v1113, %v1112
        %v1115 = vrot.slane %v1079, 2
        %v1116 = vsel %vm632, %v1115, %v1114
        %v1117 = vrot.slane %v1080, 1
        %v1118 = vsel %vm635, %v1117, %v1116
        %v1119 = vrot.slane %v1082, 7
        %v1120 = vsel %vm617, %v1119, %v1081
        %v1121 = vrot.slane %v1083, 6
        %v1122 = vsel %vm620, %v1121, %v1120
        %v1123 = vrot.slane %v1084, 5
        %v1124 = vsel %vm623, %v1123, %v1122
        %v1125 = vrot.slane %v1085, 4
        %v1126 = vsel %vm626, %v1125, %v1124
        %v1127 = vrot.slane %v1086, 3
        %v1128 = vsel %vm629, %v1127, %v1126
        %v1129 = vrot.slane %v1087, 2
        %v1130 = vsel %vm632, %v1129, %v1128
        %v1131 = vrot.slane %v1088, 1
        %v1132 = vsel %vm635, %v1131, %v1130
        %v1135 = vadd.f32 %v1069, %v1118
        %v1136 = vadd.f32 %v1070, %v1132
        %s1137 = sld [smem:[#allocation6 + $0x82]]
        %v1138 = vstv %s1137
        %v1139 = vmul.f32 %v1138, %v531
        %v1140 = vmul.f32 %v1138, %v532
        %v1141 = vmul.f32 %v1138, %v533
        %v1142 = vmul.f32 %v1138, %v534
        %v1143 = vmul.f32 %v1138, %v535
        %v1144 = vmul.f32 %v1138, %v536
        %v1145 = vmul.f32 %v1138, %v537
        %v1146 = vmul.f32 %v1138, %v538
        %v1147 = vmul.f32 %v1138, %v539
        %v1148 = vmul.f32 %v1138, %v540
        %v1149 = vmul.f32 %v1138, %v541
        %v1150 = vmul.f32 %v1138, %v542
        %v1151 = vmul.f32 %v1138, %v543
        %v1152 = vmul.f32 %v1138, %v544
        %v1153 = vmul.f32 %v1138, %v545
        %v1154 = vmul.f32 %v1138, %v546
        %v1171 = vrot.slane %v1140, 7
        %v1172 = vsel %vm617, %v1171, %v1139
        %v1173 = vrot.slane %v1141, 6
        %v1174 = vsel %vm620, %v1173, %v1172
        %v1175 = vrot.slane %v1142, 5
        %v1176 = vsel %vm623, %v1175, %v1174
        %v1177 = vrot.slane %v1143, 4
        %v1178 = vsel %vm626, %v1177, %v1176
        %v1179 = vrot.slane %v1144, 3
        %v1180 = vsel %vm629, %v1179, %v1178
        %v1181 = vrot.slane %v1145, 2
        %v1182 = vsel %vm632, %v1181, %v1180
        %v1183 = vrot.slane %v1146, 1
        %v1184 = vsel %vm635, %v1183, %v1182
        %v1185 = vrot.slane %v1148, 7
        %v1186 = vsel %vm617, %v1185, %v1147
        %v1187 = vrot.slane %v1149, 6
        %v1188 = vsel %vm620, %v1187, %v1186
        %v1189 = vrot.slane %v1150, 5
        %v1190 = vsel %vm623, %v1189, %v1188
        %v1191 = vrot.slane %v1151, 4
        %v1192 = vsel %vm626, %v1191, %v1190
        %v1193 = vrot.slane %v1152, 3
        %v1194 = vsel %vm629, %v1193, %v1192
        %v1195 = vrot.slane %v1153, 2
        %v1196 = vsel %vm632, %v1195, %v1194
        %v1197 = vrot.slane %v1154, 1
        %v1198 = vsel %vm635, %v1197, %v1196
        %v1201 = vadd.f32 %v1135, %v1184
        %v1202 = vadd.f32 %v1136, %v1198
        %s1203 = sld [smem:[#allocation6 + $0x83]]
        %v1204 = vstv %s1203
        %v1205 = vmul.f32 %v1204, %v547
        %v1206 = vmul.f32 %v1204, %v548
        %v1207 = vmul.f32 %v1204, %v549
        %v1208 = vmul.f32 %v1204, %v550
        %v1209 = vmul.f32 %v1204, %v551
        %v1210 = vmul.f32 %v1204, %v552
        %v1211 = vmul.f32 %v1204, %v553
        %v1212 = vmul.f32 %v1204, %v554
        %v1213 = vmul.f32 %v1204, %v555
        %v1214 = vmul.f32 %v1204, %v556
        %v1215 = vmul.f32 %v1204, %v557
        %v1216 = vmul.f32 %v1204, %v558
        %v1217 = vmul.f32 %v1204, %v559
        %v1218 = vmul.f32 %v1204, %v560
        %v1219 = vmul.f32 %v1204, %v561
        %v1220 = vmul.f32 %v1204, %v562
        %v1237 = vrot.slane %v1206, 7
        %v1238 = vsel %vm617, %v1237, %v1205
        %v1239 = vrot.slane %v1207, 6
        %v1240 = vsel %vm620, %v1239, %v1238
        %v1241 = vrot.slane %v1208, 5
        %v1242 = vsel %vm623, %v1241, %v1240
        %v1243 = vrot.slane %v1209, 4
        %v1244 = vsel %vm626, %v1243, %v1242
        %v1245 = vrot.slane %v1210, 3
        %v1246 = vsel %vm629, %v1245, %v1244
        %v1247 = vrot.slane %v1211, 2
        %v1248 = vsel %vm632, %v1247, %v1246
        %v1249 = vrot.slane %v1212, 1
        %v1250 = vsel %vm635, %v1249, %v1248
        %v1251 = vrot.slane %v1214, 7
        %v1252 = vsel %vm617, %v1251, %v1213
        %v1253 = vrot.slane %v1215, 6
        %v1254 = vsel %vm620, %v1253, %v1252
        %v1255 = vrot.slane %v1216, 5
        %v1256 = vsel %vm623, %v1255, %v1254
        %v1257 = vrot.slane %v1217, 4
        %v1258 = vsel %vm626, %v1257, %v1256
        %v1259 = vrot.slane %v1218, 3
        %v1260 = vsel %vm629, %v1259, %v1258
        %v1261 = vrot.slane %v1219, 2
        %v1262 = vsel %vm632, %v1261, %v1260
        %v1263 = vrot.slane %v1220, 1
        %v1264 = vsel %vm635, %v1263, %v1262
        %v1267 = vadd.f32 %v1201, %v1250
        %v1268 = vadd.f32 %v1202, %v1264
        %v1269 = vmax.f32 %v1267, 0.0
        %v1270 = vmax.f32 %v1268, 0.0
        %v1273 = vcombine.high %v1269, %v1269
        %v1275 = vunpack.c.l.s4 1966171168
        %v1276 = vunpack.c.0.s8 %v1275
        %v1277 = vlaneseq
        %v1278 = vshrl.u32 %v1277, 7
        %v1279 = vsub.s32 %v1276, %v1278
        %v1280 = vrot.slane %v1269, %v1279
        %v1282 = vunpack.c.l.s4 1966171168
        %v1283 = vunpack.c.0.s8 %v1282
        %v1284 = vlaneseq
        %v1285 = vshrl.u32 %v1284, 7
        %v1286 = vsub.s32 %v1283, %v1285
        %v1287 = vrot.slane %v1273, %v1286
        %v1288 = vcombine.high %v1280, %v1280
        %v1289 = vcombine.high %v1287, %v1287
        %v1291 = vunpack.c.l.s4 1966171168
        %v1292 = vunpack.c.0.s8 %v1291
        %v1293 = vlaneseq
        %v1294 = vshrl.u32 %v1293, 7
        %v1295 = vsub.s32 %v1292, %v1294
        %v1296 = vrot.slane %v1280, %v1295
        %v1298 = vunpack.c.l.s4 1966171168
        %v1299 = vunpack.c.0.s8 %v1298
        %v1300 = vlaneseq
        %v1301 = vshrl.u32 %v1300, 7
        %v1302 = vsub.s32 %v1299, %v1301
        %v1303 = vrot.slane %v1287, %v1302
        %v1305 = vunpack.c.l.s4 1966171168
        %v1306 = vunpack.c.0.s8 %v1305
        %v1307 = vlaneseq
        %v1308 = vshrl.u32 %v1307, 7
        %v1309 = vsub.s32 %v1306, %v1308
        %v1310 = vrot.slane %v1288, %v1309
        %v1312 = vunpack.c.l.s4 1966171168
        %v1313 = vunpack.c.0.s8 %v1312
        %v1314 = vlaneseq
        %v1315 = vshrl.u32 %v1314, 7
        %v1316 = vsub.s32 %v1313, %v1315
        %v1317 = vrot.slane %v1289, %v1316
        %v1318 = vcombine.high %v1296, %v1296
        %v1319 = vcombine.high %v1303, %v1303
        %v1320 = vcombine.high %v1310, %v1310
        %v1321 = vcombine.high %v1317, %v1317
        %v1322 = vcombine.high %v1270, %v1270
        %v1324 = vunpack.c.l.s4 1966171168
        %v1325 = vunpack.c.0.s8 %v1324
        %v1326 = vlaneseq
        %v1327 = vshrl.u32 %v1326, 7
        %v1328 = vsub.s32 %v1325, %v1327
        %v1329 = vrot.slane %v1270, %v1328
        %v1331 = vunpack.c.l.s4 1966171168
        %v1332 = vunpack.c.0.s8 %v1331
        %v1333 = vlaneseq
        %v1334 = vshrl.u32 %v1333, 7
        %v1335 = vsub.s32 %v1332, %v1334
        %v1336 = vrot.slane %v1322, %v1335
        %v1337 = vcombine.high %v1329, %v1329
        %v1338 = vcombine.high %v1336, %v1336
        %v1340 = vunpack.c.l.s4 1966171168
        %v1341 = vunpack.c.0.s8 %v1340
        %v1342 = vlaneseq
        %v1343 = vshrl.u32 %v1342, 7
        %v1344 = vsub.s32 %v1341, %v1343
        %v1345 = vrot.slane %v1329, %v1344
        %v1347 = vunpack.c.l.s4 1966171168
        %v1348 = vunpack.c.0.s8 %v1347
        %v1349 = vlaneseq
        %v1350 = vshrl.u32 %v1349, 7
        %v1351 = vsub.s32 %v1348, %v1350
        %v1352 = vrot.slane %v1336, %v1351
        %v1354 = vunpack.c.l.s4 1966171168
        %v1355 = vunpack.c.0.s8 %v1354
        %v1356 = vlaneseq
        %v1357 = vshrl.u32 %v1356, 7
        %v1358 = vsub.s32 %v1355, %v1357
        %v1359 = vrot.slane %v1337, %v1358
        %v1361 = vunpack.c.l.s4 1966171168
        %v1362 = vunpack.c.0.s8 %v1361
        %v1363 = vlaneseq
        %v1364 = vshrl.u32 %v1363, 7
        %v1365 = vsub.s32 %v1362, %v1364
        %v1366 = vrot.slane %v1338, %v1365
        %v1367 = vcombine.high %v1345, %v1345
        %v1368 = vcombine.high %v1352, %v1352
        %v1369 = vcombine.high %v1359, %v1359
        %v1370 = vcombine.high %v1366, %v1366
        %1387 = vst.msk [vmem:[%s329 + $0x1] sm:$0x1] %vm971, %v1296
        %1388 = vst.msk [vmem:[%s329 + $0x5] sm:$0x1] %vm971, %v1310
        %1389 = vst.msk [vmem:[%s329 + $0x9] sm:$0x1] %vm971, %v1318
        %1390 = vst.msk [vmem:[%s329 + $0xd] sm:$0x1] %vm971, %v1320
        %1391 = vst.msk [vmem:[%s329 + $0x11] sm:$0x1] %vm971, %v1303
        %1392 = vst.msk [vmem:[%s329 + $0x15] sm:$0x1] %vm971, %v1317
        %1393 = vst.msk [vmem:[%s329 + $0x19] sm:$0x1] %vm971, %v1319
        %1394 = vst.msk [vmem:[%s329 + $0x1d] sm:$0x1] %vm971, %v1321
        %1395 = vst.msk [vmem:[%s329 + $0x21] sm:$0x1] %vm971, %v1345
        %1396 = vst.msk [vmem:[%s329 + $0x25] sm:$0x1] %vm971, %v1359
        %1397 = vst.msk [vmem:[%s329 + $0x29] sm:$0x1] %vm971, %v1367
        %1398 = vst.msk [vmem:[%s329 + $0x2d] sm:$0x1] %vm971, %v1369
        %1399 = vst.msk [vmem:[%s329 + $0x31] sm:$0x1] %vm971, %v1352
        %1400 = vst.msk [vmem:[%s329 + $0x35] sm:$0x1] %vm971, %v1366
        %1401 = vst.msk [vmem:[%s329 + $0x39] sm:$0x1] %vm971, %v1368
        %1402 = vst.msk [vmem:[%s329 + $0x3d] sm:$0x1] %vm971, %v1370
        %s1403 = sld [smem:[#allocation7 + $0x2]]
        %v1404 = vstv %s1403
        %v1405 = vadd.f32 %v417, %v1404
        %1406 = vset.pattern.permute.xlu0 2
        %1407 = vperm.xlu0 %1406, %v491
        %v1408 = vpop.permute.xlu0 %1407
        %1410 = vset.pattern.permute.xlu0 2
        %1411 = vperm.xlu0 %1410, %v496
        %v1412 = vpop.permute.xlu0 %1411
        %v1414 = vlaneseq
        %v1415 = vshrl.u32 %v1414, 7
        %v1416 = vsub.s32 2, %v1415
        %v1417 = vrot.slane %v1405, %v1416
        %v1418 = vadd.f32 %v1408, %v1417
        %v1419 = vadd.f32 %v1412, %v1417
        %s1420 = sld [smem:[#allocation6 + $0x100]]
        %v1421 = vstv %s1420
        %v1422 = vmul.f32 %v1421, %v499
        %v1423 = vmul.f32 %v1421, %v500
        %v1424 = vmul.f32 %v1421, %v501
        %v1425 = vmul.f32 %v1421, %v502
        %v1426 = vmul.f32 %v1421, %v503
        %v1427 = vmul.f32 %v1421, %v504
        %v1428 = vmul.f32 %v1421, %v505
        %v1429 = vmul.f32 %v1421, %v506
        %v1430 = vmul.f32 %v1421, %v507
        %v1431 = vmul.f32 %v1421, %v508
        %v1432 = vmul.f32 %v1421, %v509
        %v1433 = vmul.f32 %v1421, %v510
        %v1434 = vmul.f32 %v1421, %v511
        %v1435 = vmul.f32 %v1421, %v512
        %v1436 = vmul.f32 %v1421, %v513
        %v1437 = vmul.f32 %v1421, %v514
        %v1454 = vrot.slane %v1423, 7
        %v1455 = vsel %vm617, %v1454, %v1422
        %v1456 = vrot.slane %v1424, 6
        %v1457 = vsel %vm620, %v1456, %v1455
        %v1458 = vrot.slane %v1425, 5
        %v1459 = vsel %vm623, %v1458, %v1457
        %v1460 = vrot.slane %v1426, 4
        %v1461 = vsel %vm626, %v1460, %v1459
        %v1462 = vrot.slane %v1427, 3
        %v1463 = vsel %vm629, %v1462, %v1461
        %v1464 = vrot.slane %v1428, 2
        %v1465 = vsel %vm632, %v1464, %v1463
        %v1466 = vrot.slane %v1429, 1
        %v1467 = vsel %vm635, %v1466, %v1465
        %v1468 = vrot.slane %v1431, 7
        %v1469 = vsel %vm617, %v1468, %v1430
        %v1470 = vrot.slane %v1432, 6
        %v1471 = vsel %vm620, %v1470, %v1469
        %v1472 = vrot.slane %v1433, 5
        %v1473 = vsel %vm623, %v1472, %v1471
        %v1474 = vrot.slane %v1434, 4
        %v1475 = vsel %vm626, %v1474, %v1473
        %v1476 = vrot.slane %v1435, 3
        %v1477 = vsel %vm629, %v1476, %v1475
        %v1478 = vrot.slane %v1436, 2
        %v1479 = vsel %vm632, %v1478, %v1477
        %v1480 = vrot.slane %v1437, 1
        %v1481 = vsel %vm635, %v1480, %v1479
        %v1484 = vadd.f32 %v1418, %v1467
        %v1485 = vadd.f32 %v1419, %v1481
        %s1486 = sld [smem:[#allocation6 + $0x101]]
        %v1487 = vstv %s1486
        %v1488 = vmul.f32 %v1487, %v515
        %v1489 = vmul.f32 %v1487, %v516
        %v1490 = vmul.f32 %v1487, %v517
        %v1491 = vmul.f32 %v1487, %v518
        %v1492 = vmul.f32 %v1487, %v519
        %v1493 = vmul.f32 %v1487, %v520
        %v1494 = vmul.f32 %v1487, %v521
        %v1495 = vmul.f32 %v1487, %v522
        %v1496 = vmul.f32 %v1487, %v523
        %v1497 = vmul.f32 %v1487, %v524
        %v1498 = vmul.f32 %v1487, %v525
        %v1499 = vmul.f32 %v1487, %v526
        %v1500 = vmul.f32 %v1487, %v527
        %v1501 = vmul.f32 %v1487, %v528
        %v1502 = vmul.f32 %v1487, %v529
        %v1503 = vmul.f32 %v1487, %v530
        %v1520 = vrot.slane %v1489, 7
        %v1521 = vsel %vm617, %v1520, %v1488
        %v1522 = vrot.slane %v1490, 6
        %v1523 = vsel %vm620, %v1522, %v1521
        %v1524 = vrot.slane %v1491, 5
        %v1525 = vsel %vm623, %v1524, %v1523
        %v1526 = vrot.slane %v1492, 4
        %v1527 = vsel %vm626, %v1526, %v1525
        %v1528 = vrot.slane %v1493, 3
        %v1529 = vsel %vm629, %v1528, %v1527
        %v1530 = vrot.slane %v1494, 2
        %v1531 = vsel %vm632, %v1530, %v1529
        %v1532 = vrot.slane %v1495, 1
        %v1533 = vsel %vm635, %v1532, %v1531
        %v1534 = vrot.slane %v1497, 7
        %v1535 = vsel %vm617, %v1534, %v1496
        %v1536 = vrot.slane %v1498, 6
        %v1537 = vsel %vm620, %v1536, %v1535
        %v1538 = vrot.slane %v1499, 5
        %v1539 = vsel %vm623, %v1538, %v1537
        %v1540 = vrot.slane %v1500, 4
        %v1541 = vsel %vm626, %v1540, %v1539
        %v1542 = vrot.slane %v1501, 3
        %v1543 = vsel %vm629, %v1542, %v1541
        %v1544 = vrot.slane %v1502, 2
        %v1545 = vsel %vm632, %v1544, %v1543
        %v1546 = vrot.slane %v1503, 1
        %v1547 = vsel %vm635, %v1546, %v1545
        %v1550 = vadd.f32 %v1484, %v1533
        %v1551 = vadd.f32 %v1485, %v1547
        %s1552 = sld [smem:[#allocation6 + $0x102]]
        %v1553 = vstv %s1552
        %v1554 = vmul.f32 %v1553, %v531
        %v1555 = vmul.f32 %v1553, %v532
        %v1556 = vmul.f32 %v1553, %v533
        %v1557 = vmul.f32 %v1553, %v534
        %v1558 = vmul.f32 %v1553, %v535
        %v1559 = vmul.f32 %v1553, %v536
        %v1560 = vmul.f32 %v1553, %v537
        %v1561 = vmul.f32 %v1553, %v538
        %v1562 = vmul.f32 %v1553, %v539
        %v1563 = vmul.f32 %v1553, %v540
        %v1564 = vmul.f32 %v1553, %v541
        %v1565 = vmul.f32 %v1553, %v542
        %v1566 = vmul.f32 %v1553, %v543
        %v1567 = vmul.f32 %v1553, %v544
        %v1568 = vmul.f32 %v1553, %v545
        %v1569 = vmul.f32 %v1553, %v546
        %v1586 = vrot.slane %v1555, 7
        %v1587 = vsel %vm617, %v1586, %v1554
        %v1588 = vrot.slane %v1556, 6
        %v1589 = vsel %vm620, %v1588, %v1587
        %v1590 = vrot.slane %v1557, 5
        %v1591 = vsel %vm623, %v1590, %v1589
        %v1592 = vrot.slane %v1558, 4
        %v1593 = vsel %vm626, %v1592, %v1591
        %v1594 = vrot.slane %v1559, 3
        %v1595 = vsel %vm629, %v1594, %v1593
        %v1596 = vrot.slane %v1560, 2
        %v1597 = vsel %vm632, %v1596, %v1595
        %v1598 = vrot.slane %v1561, 1
        %v1599 = vsel %vm635, %v1598, %v1597
        %v1600 = vrot.slane %v1563, 7
        %v1601 = vsel %vm617, %v1600, %v1562
        %v1602 = vrot.slane %v1564, 6
        %v1603 = vsel %vm620, %v1602, %v1601
        %v1604 = vrot.slane %v1565, 5
        %v1605 = vsel %vm623, %v1604, %v1603
        %v1606 = vrot.slane %v1566, 4
        %v1607 = vsel %vm626, %v1606, %v1605
        %v1608 = vrot.slane %v1567, 3
        %v1609 = vsel %vm629, %v1608, %v1607
        %v1610 = vrot.slane %v1568, 2
        %v1611 = vsel %vm632, %v1610, %v1609
        %v1612 = vrot.slane %v1569, 1
        %v1613 = vsel %vm635, %v1612, %v1611
        %v1616 = vadd.f32 %v1550, %v1599
        %v1617 = vadd.f32 %v1551, %v1613
        %s1618 = sld [smem:[#allocation6 + $0x103]]
        %v1619 = vstv %s1618
        %v1620 = vmul.f32 %v1619, %v547
        %v1621 = vmul.f32 %v1619, %v548
        %v1622 = vmul.f32 %v1619, %v549
        %v1623 = vmul.f32 %v1619, %v550
        %v1624 = vmul.f32 %v1619, %v551
        %v1625 = vmul.f32 %v1619, %v552
        %v1626 = vmul.f32 %v1619, %v553
        %v1627 = vmul.f32 %v1619, %v554
        %v1628 = vmul.f32 %v1619, %v555
        %v1629 = vmul.f32 %v1619, %v556
        %v1630 = vmul.f32 %v1619, %v557
        %v1631 = vmul.f32 %v1619, %v558
        %v1632 = vmul.f32 %v1619, %v559
        %v1633 = vmul.f32 %v1619, %v560
        %v1634 = vmul.f32 %v1619, %v561
        %v1635 = vmul.f32 %v1619, %v562
        %v1652 = vrot.slane %v1621, 7
        %v1653 = vsel %vm617, %v1652, %v1620
        %v1654 = vrot.slane %v1622, 6
        %v1655 = vsel %vm620, %v1654, %v1653
        %v1656 = vrot.slane %v1623, 5
        %v1657 = vsel %vm623, %v1656, %v1655
        %v1658 = vrot.slane %v1624, 4
        %v1659 = vsel %vm626, %v1658, %v1657
        %v1660 = vrot.slane %v1625, 3
        %v1661 = vsel %vm629, %v1660, %v1659
        %v1662 = vrot.slane %v1626, 2
        %v1663 = vsel %vm632, %v1662, %v1661
        %v1664 = vrot.slane %v1627, 1
        %v1665 = vsel %vm635, %v1664, %v1663
        %v1666 = vrot.slane %v1629, 7
        %v1667 = vsel %vm617, %v1666, %v1628
        %v1668 = vrot.slane %v1630, 6
        %v1669 = vsel %vm620, %v1668, %v1667
        %v1670 = vrot.slane %v1631, 5
        %v1671 = vsel %vm623, %v1670, %v1669
        %v1672 = vrot.slane %v1632, 4
        %v1673 = vsel %vm626, %v1672, %v1671
        %v1674 = vrot.slane %v1633, 3
        %v1675 = vsel %vm629, %v1674, %v1673
        %v1676 = vrot.slane %v1634, 2
        %v1677 = vsel %vm632, %v1676, %v1675
        %v1678 = vrot.slane %v1635, 1
        %v1679 = vsel %vm635, %v1678, %v1677
        %v1682 = vadd.f32 %v1616, %v1665
        %v1683 = vadd.f32 %v1617, %v1679
        %v1684 = vmax.f32 %v1682, 0.0
        %v1685 = vmax.f32 %v1683, 0.0
        %v1688 = vcombine.high %v1684, %v1684
        %v1690 = vunpack.c.l.s4 1966171168
        %v1691 = vunpack.c.0.s8 %v1690
        %v1692 = vlaneseq
        %v1693 = vshrl.u32 %v1692, 7
        %v1694 = vsub.s32 %v1691, %v1693
        %v1695 = vrot.slane %v1684, %v1694
        %v1697 = vunpack.c.l.s4 1966171168
        %v1698 = vunpack.c.0.s8 %v1697
        %v1699 = vlaneseq
        %v1700 = vshrl.u32 %v1699, 7
        %v1701 = vsub.s32 %v1698, %v1700
        %v1702 = vrot.slane %v1688, %v1701
        %v1703 = vcombine.high %v1695, %v1695
        %v1704 = vcombine.high %v1702, %v1702
        %v1706 = vunpack.c.l.s4 1966171168
        %v1707 = vunpack.c.0.s8 %v1706
        %v1708 = vlaneseq
        %v1709 = vshrl.u32 %v1708, 7
        %v1710 = vsub.s32 %v1707, %v1709
        %v1711 = vrot.slane %v1695, %v1710
        %v1713 = vunpack.c.l.s4 1966171168
        %v1714 = vunpack.c.0.s8 %v1713
        %v1715 = vlaneseq
        %v1716 = vshrl.u32 %v1715, 7
        %v1717 = vsub.s32 %v1714, %v1716
        %v1718 = vrot.slane %v1702, %v1717
        %v1720 = vunpack.c.l.s4 1966171168
        %v1721 = vunpack.c.0.s8 %v1720
        %v1722 = vlaneseq
        %v1723 = vshrl.u32 %v1722, 7
        %v1724 = vsub.s32 %v1721, %v1723
        %v1725 = vrot.slane %v1703, %v1724
        %v1727 = vunpack.c.l.s4 1966171168
        %v1728 = vunpack.c.0.s8 %v1727
        %v1729 = vlaneseq
        %v1730 = vshrl.u32 %v1729, 7
        %v1731 = vsub.s32 %v1728, %v1730
        %v1732 = vrot.slane %v1704, %v1731
        %v1733 = vcombine.high %v1711, %v1711
        %v1734 = vcombine.high %v1718, %v1718
        %v1735 = vcombine.high %v1725, %v1725
        %v1736 = vcombine.high %v1732, %v1732
        %v1737 = vcombine.high %v1685, %v1685
        %v1739 = vunpack.c.l.s4 1966171168
        %v1740 = vunpack.c.0.s8 %v1739
        %v1741 = vlaneseq
        %v1742 = vshrl.u32 %v1741, 7
        %v1743 = vsub.s32 %v1740, %v1742
        %v1744 = vrot.slane %v1685, %v1743
        %v1746 = vunpack.c.l.s4 1966171168
        %v1747 = vunpack.c.0.s8 %v1746
        %v1748 = vlaneseq
        %v1749 = vshrl.u32 %v1748, 7
        %v1750 = vsub.s32 %v1747, %v1749
        %v1751 = vrot.slane %v1737, %v1750
        %v1752 = vcombine.high %v1744, %v1744
        %v1753 = vcombine.high %v1751, %v1751
        %v1755 = vunpack.c.l.s4 1966171168
        %v1756 = vunpack.c.0.s8 %v1755
        %v1757 = vlaneseq
        %v1758 = vshrl.u32 %v1757, 7
        %v1759 = vsub.s32 %v1756, %v1758
        %v1760 = vrot.slane %v1744, %v1759
        %v1762 = vunpack.c.l.s4 1966171168
        %v1763 = vunpack.c.0.s8 %v1762
        %v1764 = vlaneseq
        %v1765 = vshrl.u32 %v1764, 7
        %v1766 = vsub.s32 %v1763, %v1765
        %v1767 = vrot.slane %v1751, %v1766
        %v1769 = vunpack.c.l.s4 1966171168
        %v1770 = vunpack.c.0.s8 %v1769
        %v1771 = vlaneseq
        %v1772 = vshrl.u32 %v1771, 7
        %v1773 = vsub.s32 %v1770, %v1772
        %v1774 = vrot.slane %v1752, %v1773
        %v1776 = vunpack.c.l.s4 1966171168
        %v1777 = vunpack.c.0.s8 %v1776
        %v1778 = vlaneseq
        %v1779 = vshrl.u32 %v1778, 7
        %v1780 = vsub.s32 %v1777, %v1779
        %v1781 = vrot.slane %v1753, %v1780
        %v1782 = vcombine.high %v1760, %v1760
        %v1783 = vcombine.high %v1767, %v1767
        %v1784 = vcombine.high %v1774, %v1774
        %v1785 = vcombine.high %v1781, %v1781
        %1802 = vst.msk [vmem:[%s329 + $0x2] sm:$0x1] %vm971, %v1711
        %1803 = vst.msk [vmem:[%s329 + $0x6] sm:$0x1] %vm971, %v1725
        %1804 = vst.msk [vmem:[%s329 + $0xa] sm:$0x1] %vm971, %v1733
        %1805 = vst.msk [vmem:[%s329 + $0xe] sm:$0x1] %vm971, %v1735
        %1806 = vst.msk [vmem:[%s329 + $0x12] sm:$0x1] %vm971, %v1718
        %1807 = vst.msk [vmem:[%s329 + $0x16] sm:$0x1] %vm971, %v1732
        %1808 = vst.msk [vmem:[%s329 + $0x1a] sm:$0x1] %vm971, %v1734
        %1809 = vst.msk [vmem:[%s329 + $0x1e] sm:$0x1] %vm971, %v1736
        %1810 = vst.msk [vmem:[%s329 + $0x22] sm:$0x1] %vm971, %v1760
        %1811 = vst.msk [vmem:[%s329 + $0x26] sm:$0x1] %vm971, %v1774
        %1812 = vst.msk [vmem:[%s329 + $0x2a] sm:$0x1] %vm971, %v1782
        %1813 = vst.msk [vmem:[%s329 + $0x2e] sm:$0x1] %vm971, %v1784
        %1814 = vst.msk [vmem:[%s329 + $0x32] sm:$0x1] %vm971, %v1767
        %1815 = vst.msk [vmem:[%s329 + $0x36] sm:$0x1] %vm971, %v1781
        %1816 = vst.msk [vmem:[%s329 + $0x3a] sm:$0x1] %vm971, %v1783
        %1817 = vst.msk [vmem:[%s329 + $0x3e] sm:$0x1] %vm971, %v1785
        %s1818 = sld [smem:[#allocation7 + $0x3]]
        %v1819 = vstv %s1818
        %v1820 = vadd.f32 %v417, %v1819
        %1821 = vset.pattern.permute.xlu0 3
        %1822 = vperm.xlu0 %1821, %v491
        %v1823 = vpop.permute.xlu0 %1822
        %1825 = vset.pattern.permute.xlu0 3
        %1826 = vperm.xlu0 %1825, %v496
        %v1827 = vpop.permute.xlu0 %1826
        %v1829 = vlaneseq
        %v1830 = vshrl.u32 %v1829, 7
        %v1831 = vsub.s32 3, %v1830
        %v1832 = vrot.slane %v1820, %v1831
        %v1833 = vadd.f32 %v1823, %v1832
        %v1834 = vadd.f32 %v1827, %v1832
        %s1835 = sld [smem:[#allocation6 + $0x180]]
        %v1836 = vstv %s1835
        %v1837 = vmul.f32 %v1836, %v499
        %v1838 = vmul.f32 %v1836, %v500
        %v1839 = vmul.f32 %v1836, %v501
        %v1840 = vmul.f32 %v1836, %v502
        %v1841 = vmul.f32 %v1836, %v503
        %v1842 = vmul.f32 %v1836, %v504
        %v1843 = vmul.f32 %v1836, %v505
        %v1844 = vmul.f32 %v1836, %v506
        %v1845 = vmul.f32 %v1836, %v507
        %v1846 = vmul.f32 %v1836, %v508
        %v1847 = vmul.f32 %v1836, %v509
        %v1848 = vmul.f32 %v1836, %v510
        %v1849 = vmul.f32 %v1836, %v511
        %v1850 = vmul.f32 %v1836, %v512
        %v1851 = vmul.f32 %v1836, %v513
        %v1852 = vmul.f32 %v1836, %v514
        %v1869 = vrot.slane %v1838, 7
        %v1870 = vsel %vm617, %v1869, %v1837
        %v1871 = vrot.slane %v1839, 6
        %v1872 = vsel %vm620, %v1871, %v1870
        %v1873 = vrot.slane %v1840, 5
        %v1874 = vsel %vm623, %v1873, %v1872
        %v1875 = vrot.slane %v1841, 4
        %v1876 = vsel %vm626, %v1875, %v1874
        %v1877 = vrot.slane %v1842, 3
        %v1878 = vsel %vm629, %v1877, %v1876
        %v1879 = vrot.slane %v1843, 2
        %v1880 = vsel %vm632, %v1879, %v1878
        %v1881 = vrot.slane %v1844, 1
        %v1882 = vsel %vm635, %v1881, %v1880
        %v1883 = vrot.slane %v1846, 7
        %v1884 = vsel %vm617, %v1883, %v1845
        %v1885 = vrot.slane %v1847, 6
        %v1886 = vsel %vm620, %v1885, %v1884
        %v1887 = vrot.slane %v1848, 5
        %v1888 = vsel %vm623, %v1887, %v1886
        %v1889 = vrot.slane %v1849, 4
        %v1890 = vsel %vm626, %v1889, %v1888
        %v1891 = vrot.slane %v1850, 3
        %v1892 = vsel %vm629, %v1891, %v1890
        %v1893 = vrot.slane %v1851, 2
        %v1894 = vsel %vm632, %v1893, %v1892
        %v1895 = vrot.slane %v1852, 1
        %v1896 = vsel %vm635, %v1895, %v1894
        %v1899 = vadd.f32 %v1833, %v1882
        %v1900 = vadd.f32 %v1834, %v1896
        %s1901 = sld [smem:[#allocation6 + $0x181]]
        %v1902 = vstv %s1901
        %v1903 = vmul.f32 %v1902, %v515
        %v1904 = vmul.f32 %v1902, %v516
        %v1905 = vmul.f32 %v1902, %v517
        %v1906 = vmul.f32 %v1902, %v518
        %v1907 = vmul.f32 %v1902, %v519
        %v1908 = vmul.f32 %v1902, %v520
        %v1909 = vmul.f32 %v1902, %v521
        %v1910 = vmul.f32 %v1902, %v522
        %v1911 = vmul.f32 %v1902, %v523
        %v1912 = vmul.f32 %v1902, %v524
        %v1913 = vmul.f32 %v1902, %v525
        %v1914 = vmul.f32 %v1902, %v526
        %v1915 = vmul.f32 %v1902, %v527
        %v1916 = vmul.f32 %v1902, %v528
        %v1917 = vmul.f32 %v1902, %v529
        %v1918 = vmul.f32 %v1902, %v530
        %v1935 = vrot.slane %v1904, 7
        %v1936 = vsel %vm617, %v1935, %v1903
        %v1937 = vrot.slane %v1905, 6
        %v1938 = vsel %vm620, %v1937, %v1936
        %v1939 = vrot.slane %v1906, 5
        %v1940 = vsel %vm623, %v1939, %v1938
        %v1941 = vrot.slane %v1907, 4
        %v1942 = vsel %vm626, %v1941, %v1940
        %v1943 = vrot.slane %v1908, 3
        %v1944 = vsel %vm629, %v1943, %v1942
        %v1945 = vrot.slane %v1909, 2
        %v1946 = vsel %vm632, %v1945, %v1944
        %v1947 = vrot.slane %v1910, 1
        %v1948 = vsel %vm635, %v1947, %v1946
        %v1949 = vrot.slane %v1912, 7
        %v1950 = vsel %vm617, %v1949, %v1911
        %v1951 = vrot.slane %v1913, 6
        %v1952 = vsel %vm620, %v1951, %v1950
        %v1953 = vrot.slane %v1914, 5
        %v1954 = vsel %vm623, %v1953, %v1952
        %v1955 = vrot.slane %v1915, 4
        %v1956 = vsel %vm626, %v1955, %v1954
        %v1957 = vrot.slane %v1916, 3
        %v1958 = vsel %vm629, %v1957, %v1956
        %v1959 = vrot.slane %v1917, 2
        %v1960 = vsel %vm632, %v1959, %v1958
        %v1961 = vrot.slane %v1918, 1
        %v1962 = vsel %vm635, %v1961, %v1960
        %v1965 = vadd.f32 %v1899, %v1948
        %v1966 = vadd.f32 %v1900, %v1962
        %s1967 = sld [smem:[#allocation6 + $0x182]]
        %v1968 = vstv %s1967
        %v1969 = vmul.f32 %v1968, %v531
        %v1970 = vmul.f32 %v1968, %v532
        %v1971 = vmul.f32 %v1968, %v533
        %v1972 = vmul.f32 %v1968, %v534
        %v1973 = vmul.f32 %v1968, %v535
        %v1974 = vmul.f32 %v1968, %v536
        %v1975 = vmul.f32 %v1968, %v537
        %v1976 = vmul.f32 %v1968, %v538
        %v1977 = vmul.f32 %v1968, %v539
        %v1978 = vmul.f32 %v1968, %v540
        %v1979 = vmul.f32 %v1968, %v541
        %v1980 = vmul.f32 %v1968, %v542
        %v1981 = vmul.f32 %v1968, %v543
        %v1982 = vmul.f32 %v1968, %v544
        %v1983 = vmul.f32 %v1968, %v545
        %v1984 = vmul.f32 %v1968, %v546
        %v2001 = vrot.slane %v1970, 7
        %v2002 = vsel %vm617, %v2001, %v1969
        %v2003 = vrot.slane %v1971, 6
        %v2004 = vsel %vm620, %v2003, %v2002
        %v2005 = vrot.slane %v1972, 5
        %v2006 = vsel %vm623, %v2005, %v2004
        %v2007 = vrot.slane %v1973, 4
        %v2008 = vsel %vm626, %v2007, %v2006
        %v2009 = vrot.slane %v1974, 3
        %v2010 = vsel %vm629, %v2009, %v2008
        %v2011 = vrot.slane %v1975, 2
        %v2012 = vsel %vm632, %v2011, %v2010
        %v2013 = vrot.slane %v1976, 1
        %v2014 = vsel %vm635, %v2013, %v2012
        %v2015 = vrot.slane %v1978, 7
        %v2016 = vsel %vm617, %v2015, %v1977
        %v2017 = vrot.slane %v1979, 6
        %v2018 = vsel %vm620, %v2017, %v2016
        %v2019 = vrot.slane %v1980, 5
        %v2020 = vsel %vm623, %v2019, %v2018
        %v2021 = vrot.slane %v1981, 4
        %v2022 = vsel %vm626, %v2021, %v2020
        %v2023 = vrot.slane %v1982, 3
        %v2024 = vsel %vm629, %v2023, %v2022
        %v2025 = vrot.slane %v1983, 2
        %v2026 = vsel %vm632, %v2025, %v2024
        %v2027 = vrot.slane %v1984, 1
        %v2028 = vsel %vm635, %v2027, %v2026
        %v2031 = vadd.f32 %v1965, %v2014
        %v2032 = vadd.f32 %v1966, %v2028
        %s2033 = sld [smem:[#allocation6 + $0x183]]
        %v2034 = vstv %s2033
        %v2035 = vmul.f32 %v2034, %v547
        %v2036 = vmul.f32 %v2034, %v548
        %v2037 = vmul.f32 %v2034, %v549
        %v2038 = vmul.f32 %v2034, %v550
        %v2039 = vmul.f32 %v2034, %v551
        %v2040 = vmul.f32 %v2034, %v552
        %v2041 = vmul.f32 %v2034, %v553
        %v2042 = vmul.f32 %v2034, %v554
        %v2043 = vmul.f32 %v2034, %v555
        %v2044 = vmul.f32 %v2034, %v556
        %v2045 = vmul.f32 %v2034, %v557
        %v2046 = vmul.f32 %v2034, %v558
        %v2047 = vmul.f32 %v2034, %v559
        %v2048 = vmul.f32 %v2034, %v560
        %v2049 = vmul.f32 %v2034, %v561
        %v2050 = vmul.f32 %v2034, %v562
        %v2067 = vrot.slane %v2036, 7
        %v2068 = vsel %vm617, %v2067, %v2035
        %v2069 = vrot.slane %v2037, 6
        %v2070 = vsel %vm620, %v2069, %v2068
        %v2071 = vrot.slane %v2038, 5
        %v2072 = vsel %vm623, %v2071, %v2070
        %v2073 = vrot.slane %v2039, 4
        %v2074 = vsel %vm626, %v2073, %v2072
        %v2075 = vrot.slane %v2040, 3
        %v2076 = vsel %vm629, %v2075, %v2074
        %v2077 = vrot.slane %v2041, 2
        %v2078 = vsel %vm632, %v2077, %v2076
        %v2079 = vrot.slane %v2042, 1
        %v2080 = vsel %vm635, %v2079, %v2078
        %v2081 = vrot.slane %v2044, 7
        %v2082 = vsel %vm617, %v2081, %v2043
        %v2083 = vrot.slane %v2045, 6
        %v2084 = vsel %vm620, %v2083, %v2082
        %v2085 = vrot.slane %v2046, 5
        %v2086 = vsel %vm623, %v2085, %v2084
        %v2087 = vrot.slane %v2047, 4
        %v2088 = vsel %vm626, %v2087, %v2086
        %v2089 = vrot.slane %v2048, 3
        %v2090 = vsel %vm629, %v2089, %v2088
        %v2091 = vrot.slane %v2049, 2
        %v2092 = vsel %vm632, %v2091, %v2090
        %v2093 = vrot.slane %v2050, 1
        %v2094 = vsel %vm635, %v2093, %v2092
        %v2097 = vadd.f32 %v2031, %v2080
        %v2098 = vadd.f32 %v2032, %v2094
        %v2099 = vmax.f32 %v2097, 0.0
        %v2100 = vmax.f32 %v2098, 0.0
        %v2103 = vcombine.high %v2099, %v2099
        %v2105 = vunpack.c.l.s4 1966171168
        %v2106 = vunpack.c.0.s8 %v2105
        %v2107 = vlaneseq
        %v2108 = vshrl.u32 %v2107, 7
        %v2109 = vsub.s32 %v2106, %v2108
        %v2110 = vrot.slane %v2099, %v2109
        %v2112 = vunpack.c.l.s4 1966171168
        %v2113 = vunpack.c.0.s8 %v2112
        %v2114 = vlaneseq
        %v2115 = vshrl.u32 %v2114, 7
        %v2116 = vsub.s32 %v2113, %v2115
        %v2117 = vrot.slane %v2103, %v2116
        %v2118 = vcombine.high %v2110, %v2110
        %v2119 = vcombine.high %v2117, %v2117
        %v2121 = vunpack.c.l.s4 1966171168
        %v2122 = vunpack.c.0.s8 %v2121
        %v2123 = vlaneseq
        %v2124 = vshrl.u32 %v2123, 7
        %v2125 = vsub.s32 %v2122, %v2124
        %v2126 = vrot.slane %v2110, %v2125
        %v2128 = vunpack.c.l.s4 1966171168
        %v2129 = vunpack.c.0.s8 %v2128
        %v2130 = vlaneseq
        %v2131 = vshrl.u32 %v2130, 7
        %v2132 = vsub.s32 %v2129, %v2131
        %v2133 = vrot.slane %v2117, %v2132
        %v2135 = vunpack.c.l.s4 1966171168
        %v2136 = vunpack.c.0.s8 %v2135
        %v2137 = vlaneseq
        %v2138 = vshrl.u32 %v2137, 7
        %v2139 = vsub.s32 %v2136, %v2138
        %v2140 = vrot.slane %v2118, %v2139
        %v2142 = vunpack.c.l.s4 1966171168
        %v2143 = vunpack.c.0.s8 %v2142
        %v2144 = vlaneseq
        %v2145 = vshrl.u32 %v2144, 7
        %v2146 = vsub.s32 %v2143, %v2145
        %v2147 = vrot.slane %v2119, %v2146
        %v2148 = vcombine.high %v2126, %v2126
        %v2149 = vcombine.high %v2133, %v2133
        %v2150 = vcombine.high %v2140, %v2140
        %v2151 = vcombine.high %v2147, %v2147
        %v2152 = vcombine.high %v2100, %v2100
        %v2154 = vunpack.c.l.s4 1966171168
        %v2155 = vunpack.c.0.s8 %v2154
        %v2156 = vlaneseq
        %v2157 = vshrl.u32 %v2156, 7
        %v2158 = vsub.s32 %v2155, %v2157
        %v2159 = vrot.slane %v2100, %v2158
        %v2161 = vunpack.c.l.s4 1966171168
        %v2162 = vunpack.c.0.s8 %v2161
        %v2163 = vlaneseq
        %v2164 = vshrl.u32 %v2163, 7
        %v2165 = vsub.s32 %v2162, %v2164
        %v2166 = vrot.slane %v2152, %v2165
        %v2167 = vcombine.high %v2159, %v2159
        %v2168 = vcombine.high %v2166, %v2166
        %v2170 = vunpack.c.l.s4 1966171168
        %v2171 = vunpack.c.0.s8 %v2170
        %v2172 = vlaneseq
        %v2173 = vshrl.u32 %v2172, 7
        %v2174 = vsub.s32 %v2171, %v2173
        %v2175 = vrot.slane %v2159, %v2174
        %v2177 = vunpack.c.l.s4 1966171168
        %v2178 = vunpack.c.0.s8 %v2177
        %v2179 = vlaneseq
        %v2180 = vshrl.u32 %v2179, 7
        %v2181 = vsub.s32 %v2178, %v2180
        %v2182 = vrot.slane %v2166, %v2181
        %v2184 = vunpack.c.l.s4 1966171168
        %v2185 = vunpack.c.0.s8 %v2184
        %v2186 = vlaneseq
        %v2187 = vshrl.u32 %v2186, 7
        %v2188 = vsub.s32 %v2185, %v2187
        %v2189 = vrot.slane %v2167, %v2188
        %v2191 = vunpack.c.l.s4 1966171168
        %v2192 = vunpack.c.0.s8 %v2191
        %v2193 = vlaneseq
        %v2194 = vshrl.u32 %v2193, 7
        %v2195 = vsub.s32 %v2192, %v2194
        %v2196 = vrot.slane %v2168, %v2195
        %v2197 = vcombine.high %v2175, %v2175
        %v2198 = vcombine.high %v2182, %v2182
        %v2199 = vcombine.high %v2189, %v2189
        %v2200 = vcombine.high %v2196, %v2196
        %2217 = vst.msk [vmem:[%s329 + $0x3] sm:$0x1] %vm971, %v2126
        %2218 = vst.msk [vmem:[%s329 + $0x7] sm:$0x1] %vm971, %v2140
        %2219 = vst.msk [vmem:[%s329 + $0xb] sm:$0x1] %vm971, %v2148
        %2220 = vst.msk [vmem:[%s329 + $0xf] sm:$0x1] %vm971, %v2150
        %2221 = vst.msk [vmem:[%s329 + $0x13] sm:$0x1] %vm971, %v2133
        %2222 = vst.msk [vmem:[%s329 + $0x17] sm:$0x1] %vm971, %v2147
        %2223 = vst.msk [vmem:[%s329 + $0x1b] sm:$0x1] %vm971, %v2149
        %2224 = vst.msk [vmem:[%s329 + $0x1f] sm:$0x1] %vm971, %v2151
        %2225 = vst.msk [vmem:[%s329 + $0x23] sm:$0x1] %vm971, %v2175
        %2226 = vst.msk [vmem:[%s329 + $0x27] sm:$0x1] %vm971, %v2189
        %2227 = vst.msk [vmem:[%s329 + $0x2b] sm:$0x1] %vm971, %v2197
        %2228 = vst.msk [vmem:[%s329 + $0x2f] sm:$0x1] %vm971, %v2199
        %2229 = vst.msk [vmem:[%s329 + $0x33] sm:$0x1] %vm971, %v2182
        %2230 = vst.msk [vmem:[%s329 + $0x37] sm:$0x1] %vm971, %v2196
        %2231 = vst.msk [vmem:[%s329 + $0x3b] sm:$0x1] %vm971, %v2198
        %2232 = vst.msk [vmem:[%s329 + $0x3f] sm:$0x1] %vm971, %v2200
        %s2233 = sand.u32 %s185, 1
        %s2234 = scalar_lea.sflag [#allocation4], %s2233
        %s2235 = sand.u32 %s185, 1
        %s2236 = smul.addr %s2235, 64
        %s2237 = scalar_lea.vmem [#allocation9], %s2236
        // Predicated region
        $region57: #{graph_cnn_layer2.1} parent=43 // pred_check
          %p2238 = pneg %p195
        $region58: #{graph_cnn_layer2.1} parent=43 // pred_check_branch
          %2240 = sbr.rel (%p2238) target = $region60
        $region59: #{graph_cnn_layer2.1} parent=43 // pred_region
          %s2241 = smul.u32 16, %s30
          %s2243 = ssub.s32 1024, 1024
          %2244 = vsyncadd %s2234, %s2243
          %s2245 = smul.addr %s29, 16
          %s2246 = sadd.s32 %s2241, %s2245
          %s2247 = smul.addr %s2246, 64
          %s2248 = scalar_lea.hbm %s6, %s2247
          %s2249 = sshll.u32 %s2237, 4
          %s2250 = int_to_ptr.vmem [resolvable:$true] %s2249
          %2255 = dma.vmem_to_hbm [thread:$0]  %s2250, 1024, %s2248, %s2234, 64, 64, 4
        $region60: #{graph_cnn_layer2.1} parent=43 // pred_fallthru
          _
      $region44: #{graph_cnn_layer2.1} parent=5 // pred_fallthru
        _
      %p2256 = scmp.le.s32.totalorder 2, %s20
      // Predicated region
      $region61: #{graph_cnn_layer2.1} parent=5 // pred_check
        %p2257 = pneg %p2256
      $region62: #{graph_cnn_layer2.1} parent=5 // pred_check_branch
        %2259 = sbr.rel (%p2257) target = $region64
      $region63: #{graph_cnn_layer2.1} parent=5 // pred_region
        %s2260 = ssub.s32 %s20, 2
        // Predicated region
        $region65: #{graph_cnn_layer2.1} parent=63 // pred_check
          %p2261 = pneg %p201
        $region66: #{graph_cnn_layer2.1} parent=63 // pred_check_branch
          %2263 = sbr.rel (%p2261) target = $region68
        $region67: #{graph_cnn_layer2.1} parent=63 // pred_region
          %s2264 = sand.u32 %s186, 1
          %s2265 = scalar_lea.sflag [#allocation4], %s2264
          %s2266 = sand.u32 %s186, 1
          %s2267 = smul.addr %s2266, 64
          %s2268 = scalar_lea.vmem [#allocation9], %s2267
          %2269 = dma.done %s2265, 1024
        $region68: #{graph_cnn_layer2.1} parent=63 // pred_fallthru
          _
      $region64: #{graph_cnn_layer2.1} parent=5 // pred_fallthru
        _
    $region6: #{graph_cnn_layer2.1} parent=1 // loop_footer
      %s24 = sadd.s32 1, %s20
    $region7: #{graph_cnn_layer2.1} parent=1 // loop_footer_branch
      %19 = sbr.rel target = $region3
    $region8: #{graph_cnn_layer2.1} parent=1 // loop_exit
      _
    %2270 = vsyncpa [#allocation3], 1
    %s2271 = scalar_lea.sflag [#allocation3], 1
    %2272 = vsyncpa %s2271, 1
    %2273 = vsyncpa [#allocation4], 1
    %s2274 = scalar_lea.sflag [#allocation4], 1
    %2275 = vsyncpa %s2274, 1
    %2276 = vsyncpa [#allocation5], 1
    %s2277 = scalar_lea.sflag [#allocation5], 1
    %2278 = vsyncpa %s2277, 1
    %2279 = vsyncpa [#allocation8], 1

</llo_original>
